<compile_context>
chip_gen: v5e
topology: v5e:2x2
jax: 0.10.0
libtpu: 0.0.40
codegen_flags: <defaults>
</compile_context>

<pallas_src>
import numpy as np
import jax
import jax.numpy as jnp
from jax.experimental import pallas as pl
from jax.experimental.pallas import tpu as pltpu

WINDOW_SIZE = 11
SIGMA = 1.5
PAD = WINDOW_SIZE // 2
C1 = 0.01 ** 2
C2 = 0.03 ** 2
_MM_PREC = jax.lax.Precision.HIGHEST   # full-f32 passes for the SSIM terms


def _gaussian_1d(window_size=WINDOW_SIZE, sigma=SIGMA):
    g = np.array(
        [np.exp(-((x - window_size // 2) ** 2) / (2.0 * sigma ** 2))
         for x in range(window_size)],
        dtype=np.float64,
    )
    return (g / g.sum()).astype(np.float32)


G1D = _gaussian_1d()                          # (11,) deterministic 1-D gaussian
W2D = np.outer(G1D, G1D).astype(np.float32)   # (11, 11) window (reference only)


def _band_matrix(n):
    """Banded (n, n) matrix A with A[i, i+k-PAD] = g[k].

    A @ x == zero-padded 1-D Gaussian conv of x along its first axis, and
    x @ A == the same conv along the last axis (g symmetric => A == A.T).
    Missing band entries encode the zero padding for free.
    """
    a = np.zeros((n, n), dtype=np.float32)
    for i in range(n):
        for k in range(WINDOW_SIZE):
            j = i + k - PAD
            if 0 <= j < n:
                a[i, j] = G1D[k]
    return a


# --------------------------------------------------------------------------
# Kernel
# --------------------------------------------------------------------------
def ssim_kernel(av_ref, aw_ref, x_ref, y_ref, out_ref, s_ref):
    # av_ref : (G*H, G*H) block-diagonal vertical band matrix
    # aw_ref : (KW, KW)   block-diagonal horizontal band matrix (KW = k*W)
    # x_ref / y_ref / out_ref : (G, H, KW) block of packed planes
    # s_ref  : (5*G*H, KW) f32 VMEM scratch for the batched horizontal pass
    G, H, KW = x_ref.shape
    n = G * H
    av = av_ref[...]
    aw = aw_ref[...]
    x = x_ref[...].astype(jnp.float32).reshape(n, KW)
    y = y_ref[...].astype(jnp.float32).reshape(n, KW)

    def mm_f32(a, b):        # full-precision MXU matmul (SSIM terms)
        return jnp.dot(a, b, preferred_element_type=jnp.float32,
                       precision=_MM_PREC)

    def mm_bf16(a, b):       # single-pass bf16 MXU matmul, f32 accumulate
        return jnp.dot(a, b, preferred_element_type=jnp.float32)

    # hi/lo bf16 split of the (constant) band matrices, built once per step.
    aw_hi = aw.astype(jnp.bfloat16)
    aw_lo = (aw - aw_hi.astype(jnp.float32)).astype(jnp.bfloat16)
    av_hi = av.astype(jnp.bfloat16)
    av_lo = (av - av_hi.astype(jnp.float32)).astype(jnp.bfloat16)

    # ---- mask = (img1>0)&(img2>0), then PAD x (gaussian blur -> >0.8) -----
    # Cheap-precision blur: mask is exact 0/1 in bf16, so the only error is
    # the dropped lo*lo cross terms (~1e-5), far below the ~2e-3 margins the
    # 0.8 threshold sees.  5 bf16 MXU passes per blur vs 12 HIGHEST passes.
    mask = jnp.logical_and(x > 0, y > 0).astype(jnp.float32)
    for _ in range(PAD):
        mb = mask.astype(jnp.bfloat16)                        # exact 0/1
        th = mm_bf16(mb, aw_hi) + mm_bf16(mb, aw_lo)          # horizontal
        th_hi = th.astype(jnp.bfloat16)
        th_lo = (th - th_hi.astype(jnp.float32)).astype(jnp.bfloat16)
        blur = (mm_bf16(av_hi, th_hi) + mm_bf16(av_lo, th_hi)
                + mm_bf16(av_hi, th_lo))                      # vertical
        mask = (blur > 0.8).astype(jnp.float32)

    # ---- 5 SSIM conv operands: one batched horizontal MXU pass ------------
    if n % 8 == 0:
        # write operands straight into the VMEM slab (no concat temp)
        s_ref[0 * n:1 * n, :] = x
        s_ref[1 * n:2 * n, :] = y
        s_ref[2 * n:3 * n, :] = x * x
        s_ref[3 * n:4 * n, :] = y * y
        s_ref[4 * n:5 * n, :] = x * y
        stacked = s_ref[...]
    else:
        stacked = jnp.concatenate([x, y, x * x, y * y, x * y], axis=0)
    th = mm_f32(stacked, aw)

    # vertical pass: block-diagonal Av => one matmul per operand, no loop.
    mu1 = mm_f32(av, th[0 * n:1 * n, :])
    mu2 = mm_f32(av, th[1 * n:2 * n, :])
    exx = mm_f32(av, th[2 * n:3 * n, :])
    eyy = mm_f32(av, th[3 * n:4 * n, :])
    exy = mm_f32(av, th[4 * n:5 * n, :])

    mu1_sq = mu1 * mu1
    mu2_sq = mu2 * mu2
    mu1_mu2 = mu1 * mu2
    sigma1_sq = exx - mu1_sq
    sigma2_sq = eyy - mu2_sq
    sigma12 = exy - mu1_mu2

    ssim_map = ((2.0 * mu1_mu2 + C1) * (2.0 * sigma12 + C2)
                / ((mu1_sq + mu2_sq + C1) * (sigma1_sq + sigma2_sq + C2)))
    ssim_map = ssim_map * mask
    ssim_map = jnp.clip((1.0 - ssim_map) * 0.5, 0.0, 1.0)
    out_ref[...] = ssim_map.reshape(G, H, KW).astype(out_ref.dtype)


# --------------------------------------------------------------------------
# Wrapper: generation-aware tiling decisions
# --------------------------------------------------------------------------
def _device_kind():
    try:
        return jax.devices()[0].device_kind.lower()
    except Exception:
        return ""


def _vmem_limit_bytes(kind):
    if "v7" in kind:                               # 64 MiB physical per TC
        return 48 * 1024 * 1024
    if ("v5" in kind) or ("v6" in kind) or ("lite" in kind):   # 128 MiB
        return 96 * 1024 * 1024
    return 64 * 1024 * 1024


def _choose_pack(P, W):
    """Largest k dividing P with k*W <= 128: lane-dense stores + MXU-wide N."""
    k = 1
    for cand in range(1, P + 1):
        if P % cand == 0 and cand * W <= 128:
            k = cand
    return k


def _choose_group(Pk, H, KW, kind, vmem_budget):
    """Packed planes per grid step.

    Constraints: (a) the (G,H,KW)->(G*H,KW) flatten must stay layout
    preserving (H % 8 == 0 when G > 1); (b) G*H stays within one MXU weight
    block (256 on v6e/v7x, 128 otherwise) so the block-diagonal Av does not
    waste passes on zero off-diagonal blocks; (c) the real in-kernel
    footprint (~48x the input block of live f32 temporaries + pipeline
    buffers + band matrices) fits the per-generation VMEM budget; (d) keep
    >= 2 grid steps whenever possible so megacore (v7x) can shard the
    'parallel' axis across both TensorCores.
    """
    if H % 8 != 0:
        return 1
    mxu = 256 if ("v6" in kind or "v7" in kind) else 128
    best = 1
    for cand in range(1, Pk + 1):
        if Pk % cand != 0:
            continue
        if cand > 1 and cand * H > max(mxu, H):
            continue
        if Pk >= 2 and Pk // cand < 2:
            continue
        blk = cand * H * KW * 4
        bands = ((cand * H) ** 2 + KW * KW) * 4 * 2
        if 48 * blk + bands > vmem_budget:
            continue
        best = cand
    return best


def ssim_loss_pallas(img1, img2):
    """Pallas implementation of SSIMLoss.forward (returns the full loss map)."""
    B, C, H, W = img1.shape
    P = B * C
    kind = _device_kind()

    # 1) lane-pack k planes: (P, H, W) -> (P/k, H, k*W)
    k = _choose_pack(P, W)
    Pk, KW = P // k, k * W
    x = img1.reshape(P, H, W)
    y = img2.reshape(P, H, W)
    if k > 1:
        x = x.reshape(Pk, k, H, W).transpose(0, 2, 1, 3).reshape(Pk, H, KW)
        y = y.reshape(Pk, k, H, W).transpose(0, 2, 1, 3).reshape(Pk, H, KW)
    else:
        x = x.reshape(Pk, H, KW)
        y = y.reshape(Pk, H, KW)

    vmem_limit = _vmem_limit_bytes(kind)
    # 2) group G packed planes per grid step
    G = _choose_group(Pk, H, KW, kind, vmem_budget=(vmem_limit * 3) // 4)
    n = G * H

    # block-diagonal band matrices (implicit per-plane zero padding)
    av = jnp.asarray(np.kron(np.eye(G, dtype=np.float32), _band_matrix(H)))
    aw = jnp.asarray(np.kron(np.eye(k, dtype=np.float32), _band_matrix(W)))

    out = pl.pallas_call(
        ssim_kernel,
        out_shape=jax.ShapeDtypeStruct((Pk, H, KW), jnp.float32),
        grid_spec=pltpu.PrefetchScalarGridSpec(
            num_scalar_prefetch=0,
            grid=(Pk // G,),
            in_specs=[
                pl.BlockSpec((n, n), lambda i: (0, 0)),        # Av (constant)
                pl.BlockSpec((KW, KW), lambda i: (0, 0)),      # Aw (constant)
                pl.BlockSpec((G, H, KW), lambda i: (i, 0, 0)),  # img1 planes
                pl.BlockSpec((G, H, KW), lambda i: (i, 0, 0)),  # img2 planes
            ],
            out_specs=pl.BlockSpec((G, H, KW), lambda i: (i, 0, 0)),
            scratch_shapes=[pltpu.VMEM((5 * n, KW), jnp.float32)],
        ),
        compiler_params=pltpu.CompilerParams(
            dimension_semantics=("parallel",),
            vmem_limit_bytes=vmem_limit),
    )(av, aw, x, y)

    if k > 1:
        out = out.reshape(Pk, H, k, W).transpose(0, 2, 1, 3)
    return out.reshape(B, C, H, W)


# --------------------------------------------------------------------------
# Pure-JAX reference mirroring the PyTorch module (depthwise conv2d)
# --------------------------------------------------------------------------
def ssim_loss_reference(img1, img2):
    B, C, H, W = img1.shape
    K = WINDOW_SIZE
    win = jnp.broadcast_to(jnp.asarray(W2D)[None, None], (C, 1, K, K))

    def conv(a):
        return jax.lax.conv_general_dilated(
            a, win, window_strides=(1, 1),
            padding=[(PAD, PAD), (PAD, PAD)],
            feature_group_count=C,
            dimension_numbers=("NCHW", "OIHW", "NCHW"),
            precision=jax.lax.Precision.HIGHEST)

    mask = jnp.logical_and(img1 > 0, img2 > 0).astype(jnp.float32)
    for _ in range(PAD):
        mask = (conv(mask) > 0.8).astype(jnp.float32)

    mu1, mu2 = conv(img1), conv(img2)
    mu1_sq, mu2_sq, mu1_mu2 = mu1 * mu1, mu2 * mu2, mu1 * mu2
    sigma1_sq = conv(img1 * img1) - mu1_sq
    sigma2_sq = conv(img2 * img2) - mu2_sq
    sigma12 = conv(img1 * img2) - mu1_mu2
    ssim_map = ((2 * mu1_mu2 + C1) * (2 * sigma12 + C2)
                / ((mu1_sq + mu2_sq + C1) * (sigma1_sq + sigma2_sq + C2)))
    ssim_map = ssim_map * mask
    return jnp.clip((1.0 - ssim_map) / 2.0, 0.0, 1.0)


if __name__ == "__main__":
    key = jax.random.PRNGKey(0)
    k1, k2 = jax.random.split(key)
    B, C, H, W = 2, 4, 16, 16
    img1 = jax.random.uniform(k1, (B, C, H, W), jnp.float32, 0.05, 1.0)
    img2 = jax.random.uniform(k2, (B, C, H, W), jnp.float32, 0.05, 1.0)

    out = ssim_loss_pallas(img1, img2)
    jax.block_until_ready(out)

    ref = ssim_loss_reference(img1, img2)
    assert out.shape == (B, C, H, W)
    err = float(jnp.max(jnp.abs(out - ref)))
    if err > 1e-3:
        raise AssertionError(f"mismatch vs reference: max abs err {err}")
    print("KERNEL_OK")
</pallas_src>

<mosaic_0001>
module attributes {stable_mosaic.version = 11 : i64} {
  func.func @ssim_kernel(%arg0: i32, %arg1: memref<16x16xf32, #tpu.memory_space<vmem>>, %arg2: memref<128x128xf32, #tpu.memory_space<vmem>>, %arg3: memref<1x16x128xf32, #tpu.memory_space<vmem>>, %arg4: memref<1x16x128xf32, #tpu.memory_space<vmem>>, %arg5: memref<1x16x128xf32, #tpu.memory_space<vmem>>, %arg6: memref<80x128xf32, #tpu.memory_space<vmem>>) attributes {dimension_semantics = [#tpu.dimension_semantics<parallel>], iteration_bounds = array<i64: 1>, scalar_prefetch = 0 : i64, scratch_operands = 1 : i64, tpu.core_type = #tpu.core_type<tc>, window_params = [{pipeline_mode = #tpu.pipeline_mode<synchronous>, transform_indices = @transform_0, window_bounds = array<i64: 16, 16>}, {pipeline_mode = #tpu.pipeline_mode<synchronous>, transform_indices = @transform_1, window_bounds = array<i64: 128, 128>}, {transform_indices = @transform_2, window_bounds = array<i64: 1, 16, 128>}, {transform_indices = @transform_3, window_bounds = array<i64: 1, 16, 128>}, {transform_indices = @transform_4, window_bounds = array<i64: 1, 16, 128>}]} {
    %c0 = arith.constant 0 : index
    %c0_0 = arith.constant 0 : index
    %0 = vector.load %arg1[%c0, %c0_0] : memref<16x16xf32, #tpu.memory_space<vmem>>, vector<16x16xf32>
    %c0_1 = arith.constant 0 : index
    %c0_2 = arith.constant 0 : index
    %1 = vector.load %arg2[%c0_1, %c0_2] : memref<128x128xf32, #tpu.memory_space<vmem>>, vector<128x128xf32>
    %c0_3 = arith.constant 0 : index
    %c0_4 = arith.constant 0 : index
    %c0_5 = arith.constant 0 : index
    %2 = vector.load %arg3[%c0_3, %c0_4, %c0_5] : memref<1x16x128xf32, #tpu.memory_space<vmem>>, vector<1x16x128xf32>
    %3 = vector.shape_cast %2 : vector<1x16x128xf32> to vector<16x128xf32>
    %c0_6 = arith.constant 0 : index
    %c0_7 = arith.constant 0 : index
    %c0_8 = arith.constant 0 : index
    %4 = vector.load %arg4[%c0_6, %c0_7, %c0_8] : memref<1x16x128xf32, #tpu.memory_space<vmem>>, vector<1x16x128xf32>
    %5 = vector.shape_cast %4 : vector<1x16x128xf32> to vector<16x128xf32>
    %6 = arith.truncf %1 : vector<128x128xf32> to vector<128x128xbf16>
    %7 = arith.extf %6 : vector<128x128xbf16> to vector<128x128xf32>
    %8 = arith.subf %1, %7 : vector<128x128xf32>
    %9 = arith.truncf %8 : vector<128x128xf32> to vector<128x128xbf16>
    %10 = arith.truncf %0 : vector<16x16xf32> to vector<16x16xbf16>
    %11 = arith.extf %10 : vector<16x16xbf16> to vector<16x16xf32>
    %12 = arith.subf %0, %11 : vector<16x16xf32>
    %13 = arith.truncf %12 : vector<16x16xf32> to vector<16x16xbf16>
    %cst = arith.constant 0.000000e+00 : f32
    %14 = vector.broadcast %cst : f32 to vector<16x128xf32>
    %15 = arith.cmpf ogt, %3, %14 : vector<16x128xf32>
    %cst_9 = arith.constant 0.000000e+00 : f32
    %16 = vector.broadcast %cst_9 : f32 to vector<16x128xf32>
    %17 = arith.cmpf ogt, %5, %16 : vector<16x128xf32>
    %18 = arith.andi %15, %17 : vector<16x128xi1>
    %19 = arith.extui %18 : vector<16x128xi1> to vector<16x128xi32>
    %20 = arith.sitofp %19 : vector<16x128xi32> to vector<16x128xf32>
    %21 = arith.truncf %20 : vector<16x128xf32> to vector<16x128xbf16>
    %cst_10 = arith.constant dense<0.000000e+00> : vector<16x128xf32>
    %22 = tpu.matmul %21, %6, %cst_10 {dimension_numbers = #tpu.dot_dimension_numbers<[1], [0], [0], [1], [0, 0, 1, 1], [], []>} : vector<16x128xbf16>, vector<128x128xbf16>, vector<16x128xf32> -> vector<16x128xf32>
    %cst_11 = arith.constant dense<0.000000e+00> : vector<16x128xf32>
    %23 = tpu.matmul %21, %9, %cst_11 {dimension_numbers = #tpu.dot_dimension_numbers<[1], [0], [0], [1], [0, 0, 1, 1], [], []>} : vector<16x128xbf16>, vector<128x128xbf16>, vector<16x128xf32> -> vector<16x128xf32>
    %24 = arith.addf %22, %23 : vector<16x128xf32>
    %25 = arith.truncf %24 : vector<16x128xf32> to vector<16x128xbf16>
    %26 = arith.extf %25 : vector<16x128xbf16> to vector<16x128xf32>
    %27 = arith.subf %24, %26 : vector<16x128xf32>
    %28 = arith.truncf %27 : vector<16x128xf32> to vector<16x128xbf16>
    %cst_12 = arith.constant dense<0.000000e+00> : vector<16x128xf32>
    %29 = tpu.matmul %10, %25, %cst_12 {dimension_numbers = #tpu.dot_dimension_numbers<[1], [0], [0], [1], [0, 0, 1, 1], [], []>} : vector<16x16xbf16>, vector<16x128xbf16>, vector<16x128xf32> -> vector<16x128xf32>
    %cst_13 = arith.constant dense<0.000000e+00> : vector<16x128xf32>
    %30 = tpu.matmul %13, %25, %cst_13 {dimension_numbers = #tpu.dot_dimension_numbers<[1], [0], [0], [1], [0, 0, 1, 1], [], []>} : vector<16x16xbf16>, vector<16x128xbf16>, vector<16x128xf32> -> vector<16x128xf32>
    %31 = arith.addf %29, %30 : vector<16x128xf32>
    %cst_14 = arith.constant dense<0.000000e+00> : vector<16x128xf32>
    %32 = tpu.matmul %10, %28, %cst_14 {dimension_numbers = #tpu.dot_dimension_numbers<[1], [0], [0], [1], [0, 0, 1, 1], [], []>} : vector<16x16xbf16>, vector<16x128xbf16>, vector<16x128xf32> -> vector<16x128xf32>
    %33 = arith.addf %31, %32 : vector<16x128xf32>
    %cst_15 = arith.constant 8.000000e-01 : f32
    %34 = vector.broadcast %cst_15 : f32 to vector<16x128xf32>
    %35 = arith.cmpf ogt, %33, %34 : vector<16x128xf32>
    %36 = arith.extui %35 : vector<16x128xi1> to vector<16x128xi32>
    %37 = arith.sitofp %36 : vector<16x128xi32> to vector<16x128xf32>
    %38 = arith.truncf %37 : vector<16x128xf32> to vector<16x128xbf16>
    %cst_16 = arith.constant dense<0.000000e+00> : vector<16x128xf32>
    %39 = tpu.matmul %38, %6, %cst_16 {dimension_numbers = #tpu.dot_dimension_numbers<[1], [0], [0], [1], [0, 0, 1, 1], [], []>} : vector<16x128xbf16>, vector<128x128xbf16>, vector<16x128xf32> -> vector<16x128xf32>
    %cst_17 = arith.constant dense<0.000000e+00> : vector<16x128xf32>
    %40 = tpu.matmul %38, %9, %cst_17 {dimension_numbers = #tpu.dot_dimension_numbers<[1], [0], [0], [1], [0, 0, 1, 1], [], []>} : vector<16x128xbf16>, vector<128x128xbf16>, vector<16x128xf32> -> vector<16x128xf32>
    %41 = arith.addf %39, %40 : vector<16x128xf32>
    %42 = arith.truncf %41 : vector<16x128xf32> to vector<16x128xbf16>
    %43 = arith.extf %42 : vector<16x128xbf16> to vector<16x128xf32>
    %44 = arith.subf %41, %43 : vector<16x128xf32>
    %45 = arith.truncf %44 : vector<16x128xf32> to vector<16x128xbf16>
    %cst_18 = arith.constant dense<0.000000e+00> : vector<16x128xf32>
    %46 = tpu.matmul %10, %42, %cst_18 {dimension_numbers = #tpu.dot_dimension_numbers<[1], [0], [0], [1], [0, 0, 1, 1], [], []>} : vector<16x16xbf16>, vector<16x128xbf16>, vector<16x128xf32> -> vector<16x128xf32>
    %cst_19 = arith.constant dense<0.000000e+00> : vector<16x128xf32>
    %47 = tpu.matmul %13, %42, %cst_19 {dimension_numbers = #tpu.dot_dimension_numbers<[1], [0], [0], [1], [0, 0, 1, 1], [], []>} : vector<16x16xbf16>, vector<16x128xbf16>, vector<16x128xf32> -> vector<16x128xf32>
    %48 = arith.addf %46, %47 : vector<16x128xf32>
    %cst_20 = arith.constant dense<0.000000e+00> : vector<16x128xf32>
    %49 = tpu.matmul %10, %45, %cst_20 {dimension_numbers = #tpu.dot_dimension_numbers<[1], [0], [0], [1], [0, 0, 1, 1], [], []>} : vector<16x16xbf16>, vector<16x128xbf16>, vector<16x128xf32> -> vector<16x128xf32>
    %50 = arith.addf %48, %49 : vector<16x128xf32>
    %cst_21 = arith.constant 8.000000e-01 : f32
    %51 = vector.broadcast %cst_21 : f32 to vector<16x128xf32>
    %52 = arith.cmpf ogt, %50, %51 : vector<16x128xf32>
    %53 = arith.extui %52 : vector<16x128xi1> to vector<16x128xi32>
    %54 = arith.sitofp %53 : vector<16x128xi32> to vector<16x128xf32>
    %55 = arith.truncf %54 : vector<16x128xf32> to vector<16x128xbf16>
    %cst_22 = arith.constant dense<0.000000e+00> : vector<16x128xf32>
    %56 = tpu.matmul %55, %6, %cst_22 {dimension_numbers = #tpu.dot_dimension_numbers<[1], [0], [0], [1], [0, 0, 1, 1], [], []>} : vector<16x128xbf16>, vector<128x128xbf16>, vector<16x128xf32> -> vector<16x128xf32>
    %cst_23 = arith.constant dense<0.000000e+00> : vector<16x128xf32>
    %57 = tpu.matmul %55, %9, %cst_23 {dimension_numbers = #tpu.dot_dimension_numbers<[1], [0], [0], [1], [0, 0, 1, 1], [], []>} : vector<16x128xbf16>, vector<128x128xbf16>, vector<16x128xf32> -> vector<16x128xf32>
    %58 = arith.addf %56, %57 : vector<16x128xf32>
    %59 = arith.truncf %58 : vector<16x128xf32> to vector<16x128xbf16>
    %60 = arith.extf %59 : vector<16x128xbf16> to vector<16x128xf32>
    %61 = arith.subf %58, %60 : vector<16x128xf32>
    %62 = arith.truncf %61 : vector<16x128xf32> to vector<16x128xbf16>
    %cst_24 = arith.constant dense<0.000000e+00> : vector<16x128xf32>
    %63 = tpu.matmul %10, %59, %cst_24 {dimension_numbers = #tpu.dot_dimension_numbers<[1], [0], [0], [1], [0, 0, 1, 1], [], []>} : vector<16x16xbf16>, vector<16x128xbf16>, vector<16x128xf32> -> vector<16x128xf32>
    %cst_25 = arith.constant dense<0.000000e+00> : vector<16x128xf32>
    %64 = tpu.matmul %13, %59, %cst_25 {dimension_numbers = #tpu.dot_dimension_numbers<[1], [0], [0], [1], [0, 0, 1, 1], [], []>} : vector<16x16xbf16>, vector<16x128xbf16>, vector<16x128xf32> -> vector<16x128xf32>
    %65 = arith.addf %63, %64 : vector<16x128xf32>
    %cst_26 = arith.constant dense<0.000000e+00> : vector<16x128xf32>
    %66 = tpu.matmul %10, %62, %cst_26 {dimension_numbers = #tpu.dot_dimension_numbers<[1], [0], [0], [1], [0, 0, 1, 1], [], []>} : vector<16x16xbf16>, vector<16x128xbf16>, vector<16x128xf32> -> vector<16x128xf32>
    %67 = arith.addf %65, %66 : vector<16x128xf32>
    %cst_27 = arith.constant 8.000000e-01 : f32
    %68 = vector.broadcast %cst_27 : f32 to vector<16x128xf32>
    %69 = arith.cmpf ogt, %67, %68 : vector<16x128xf32>
    %70 = arith.extui %69 : vector<16x128xi1> to vector<16x128xi32>
    %71 = arith.sitofp %70 : vector<16x128xi32> to vector<16x128xf32>
    %72 = arith.truncf %71 : vector<16x128xf32> to vector<16x128xbf16>
    %cst_28 = arith.constant dense<0.000000e+00> : vector<16x128xf32>
    %73 = tpu.matmul %72, %6, %cst_28 {dimension_numbers = #tpu.dot_dimension_numbers<[1], [0], [0], [1], [0, 0, 1, 1], [], []>} : vector<16x128xbf16>, vector<128x128xbf16>, vector<16x128xf32> -> vector<16x128xf32>
    %cst_29 = arith.constant dense<0.000000e+00> : vector<16x128xf32>
    %74 = tpu.matmul %72, %9, %cst_29 {dimension_numbers = #tpu.dot_dimension_numbers<[1], [0], [0], [1], [0, 0, 1, 1], [], []>} : vector<16x128xbf16>, vector<128x128xbf16>, vector<16x128xf32> -> vector<16x128xf32>
    %75 = arith.addf %73, %74 : vector<16x128xf32>
    %76 = arith.truncf %75 : vector<16x128xf32> to vector<16x128xbf16>
    %77 = arith.extf %76 : vector<16x128xbf16> to vector<16x128xf32>
    %78 = arith.subf %75, %77 : vector<16x128xf32>
    %79 = arith.truncf %78 : vector<16x128xf32> to vector<16x128xbf16>
    %cst_30 = arith.constant dense<0.000000e+00> : vector<16x128xf32>
    %80 = tpu.matmul %10, %76, %cst_30 {dimension_numbers = #tpu.dot_dimension_numbers<[1], [0], [0], [1], [0, 0, 1, 1], [], []>} : vector<16x16xbf16>, vector<16x128xbf16>, vector<16x128xf32> -> vector<16x128xf32>
    %cst_31 = arith.constant dense<0.000000e+00> : vector<16x128xf32>
    %81 = tpu.matmul %13, %76, %cst_31 {dimension_numbers = #tpu.dot_dimension_numbers<[1], [0], [0], [1], [0, 0, 1, 1], [], []>} : vector<16x16xbf16>, vector<16x128xbf16>, vector<16x128xf32> -> vector<16x128xf32>
    %82 = arith.addf %80, %81 : vector<16x128xf32>
    %cst_32 = arith.constant dense<0.000000e+00> : vector<16x128xf32>
    %83 = tpu.matmul %10, %79, %cst_32 {dimension_numbers = #tpu.dot_dimension_numbers<[1], [0], [0], [1], [0, 0, 1, 1], [], []>} : vector<16x16xbf16>, vector<16x128xbf16>, vector<16x128xf32> -> vector<16x128xf32>
    %84 = arith.addf %82, %83 : vector<16x128xf32>
    %cst_33 = arith.constant 8.000000e-01 : f32
    %85 = vector.broadcast %cst_33 : f32 to vector<16x128xf32>
    %86 = arith.cmpf ogt, %84, %85 : vector<16x128xf32>
    %87 = arith.extui %86 : vector<16x128xi1> to vector<16x128xi32>
    %88 = arith.sitofp %87 : vector<16x128xi32> to vector<16x128xf32>
    %89 = arith.truncf %88 : vector<16x128xf32> to vector<16x128xbf16>
    %cst_34 = arith.constant dense<0.000000e+00> : vector<16x128xf32>
    %90 = tpu.matmul %89, %6, %cst_34 {dimension_numbers = #tpu.dot_dimension_numbers<[1], [0], [0], [1], [0, 0, 1, 1], [], []>} : vector<16x128xbf16>, vector<128x128xbf16>, vector<16x128xf32> -> vector<16x128xf32>
    %cst_35 = arith.constant dense<0.000000e+00> : vector<16x128xf32>
    %91 = tpu.matmul %89, %9, %cst_35 {dimension_numbers = #tpu.dot_dimension_numbers<[1], [0], [0], [1], [0, 0, 1, 1], [], []>} : vector<16x128xbf16>, vector<128x128xbf16>, vector<16x128xf32> -> vector<16x128xf32>
    %92 = arith.addf %90, %91 : vector<16x128xf32>
    %93 = arith.truncf %92 : vector<16x128xf32> to vector<16x128xbf16>
    %94 = arith.extf %93 : vector<16x128xbf16> to vector<16x128xf32>
    %95 = arith.subf %92, %94 : vector<16x128xf32>
    %96 = arith.truncf %95 : vector<16x128xf32> to vector<16x128xbf16>
    %cst_36 = arith.constant dense<0.000000e+00> : vector<16x128xf32>
    %97 = tpu.matmul %10, %93, %cst_36 {dimension_numbers = #tpu.dot_dimension_numbers<[1], [0], [0], [1], [0, 0, 1, 1], [], []>} : vector<16x16xbf16>, vector<16x128xbf16>, vector<16x128xf32> -> vector<16x128xf32>
    %cst_37 = arith.constant dense<0.000000e+00> : vector<16x128xf32>
    %98 = tpu.matmul %13, %93, %cst_37 {dimension_numbers = #tpu.dot_dimension_numbers<[1], [0], [0], [1], [0, 0, 1, 1], [], []>} : vector<16x16xbf16>, vector<16x128xbf16>, vector<16x128xf32> -> vector<16x128xf32>
    %99 = arith.addf %97, %98 : vector<16x128xf32>
    %cst_38 = arith.constant dense<0.000000e+00> : vector<16x128xf32>
    %100 = tpu.matmul %10, %96, %cst_38 {dimension_numbers = #tpu.dot_dimension_numbers<[1], [0], [0], [1], [0, 0, 1, 1], [], []>} : vector<16x16xbf16>, vector<16x128xbf16>, vector<16x128xf32> -> vector<16x128xf32>
    %101 = arith.addf %99, %100 : vector<16x128xf32>
    %cst_39 = arith.constant 8.000000e-01 : f32
    %102 = vector.broadcast %cst_39 : f32 to vector<16x128xf32>
    %103 = arith.cmpf ogt, %101, %102 : vector<16x128xf32>
    %104 = arith.extui %103 : vector<16x128xi1> to vector<16x128xi32>
    %105 = arith.sitofp %104 : vector<16x128xi32> to vector<16x128xf32>
    %c0_40 = arith.constant 0 : index
    %c0_41 = arith.constant 0 : index
    %106 = vector.load %arg6[%c0_40, %c0_41] : memref<80x128xf32, #tpu.memory_space<vmem>>, vector<16x128xf32>
    tpu.vector_store %arg6[%c0_40, %c0_41], %3 {strides = array<i32>} : memref<80x128xf32, #tpu.memory_space<vmem>>, vector<16x128xf32>,
    %c16 = arith.constant 16 : index
    %c0_42 = arith.constant 0 : index
    %107 = vector.load %arg6[%c16, %c0_42] : memref<80x128xf32, #tpu.memory_space<vmem>>, vector<16x128xf32>
    tpu.vector_store %arg6[%c16, %c0_42], %5 {strides = array<i32>} : memref<80x128xf32, #tpu.memory_space<vmem>>, vector<16x128xf32>,
    %108 = arith.mulf %3, %3 : vector<16x128xf32>
    %c32 = arith.constant 32 : index
    %c0_43 = arith.constant 0 : index
    %109 = vector.load %arg6[%c32, %c0_43] : memref<80x128xf32, #tpu.memory_space<vmem>>, vector<16x128xf32>
    tpu.vector_store %arg6[%c32, %c0_43], %108 {strides = array<i32>} : memref<80x128xf32, #tpu.memory_space<vmem>>, vector<16x128xf32>,
    %110 = arith.mulf %5, %5 : vector<16x128xf32>
    %c48 = arith.constant 48 : index
    %c0_44 = arith.constant 0 : index
    %111 = vector.load %arg6[%c48, %c0_44] : memref<80x128xf32, #tpu.memory_space<vmem>>, vector<16x128xf32>
    tpu.vector_store %arg6[%c48, %c0_44], %110 {strides = array<i32>} : memref<80x128xf32, #tpu.memory_space<vmem>>, vector<16x128xf32>,
    %112 = arith.mulf %3, %5 : vector<16x128xf32>
    %c64 = arith.constant 64 : index
    %c0_45 = arith.constant 0 : index
    %113 = vector.load %arg6[%c64, %c0_45] : memref<80x128xf32, #tpu.memory_space<vmem>>, vector<16x128xf32>
    tpu.vector_store %arg6[%c64, %c0_45], %112 {strides = array<i32>} : memref<80x128xf32, #tpu.memory_space<vmem>>, vector<16x128xf32>,
    %c0_46 = arith.constant 0 : index
    %c0_47 = arith.constant 0 : index
    %114 = vector.load %arg6[%c0_46, %c0_47] : memref<80x128xf32, #tpu.memory_space<vmem>>, vector<80x128xf32>
    %cst_48 = arith.constant dense<0.000000e+00> : vector<80x128xf32>
    %115 = tpu.matmul %114, %1, %cst_48 {dimension_numbers = #tpu.dot_dimension_numbers<[1], [0], [0], [1], [0, 0, 1, 1], [], []>, precision = #tpu.contract_precision<fp32>} : vector<80x128xf32>, vector<128x128xf32>, vector<80x128xf32> -> vector<80x128xf32>
    %116 = vector.extract_strided_slice %115 {offsets = [0, 0], sizes = [16, 128], strides = [1, 1]} : vector<80x128xf32> to vector<16x128xf32>
    %cst_49 = arith.constant dense<0.000000e+00> : vector<16x128xf32>
    %117 = tpu.matmul %0, %116, %cst_49 {dimension_numbers = #tpu.dot_dimension_numbers<[1], [0], [0], [1], [0, 0, 1, 1], [], []>, precision = #tpu.contract_precision<fp32>} : vector<16x16xf32>, vector<16x128xf32>, vector<16x128xf32> -> vector<16x128xf32>
    %118 = vector.extract_strided_slice %115 {offsets = [16, 0], sizes = [16, 128], strides = [1, 1]} : vector<80x128xf32> to vector<16x128xf32>
    %cst_50 = arith.constant dense<0.000000e+00> : vector<16x128xf32>
    %119 = tpu.matmul %0, %118, %cst_50 {dimension_numbers = #tpu.dot_dimension_numbers<[1], [0], [0], [1], [0, 0, 1, 1], [], []>, precision = #tpu.contract_precision<fp32>} : vector<16x16xf32>, vector<16x128xf32>, vector<16x128xf32> -> vector<16x128xf32>
    %120 = vector.extract_strided_slice %115 {offsets = [32, 0], sizes = [16, 128], strides = [1, 1]} : vector<80x128xf32> to vector<16x128xf32>
    %cst_51 = arith.constant dense<0.000000e+00> : vector<16x128xf32>
    %121 = tpu.matmul %0, %120, %cst_51 {dimension_numbers = #tpu.dot_dimension_numbers<[1], [0], [0], [1], [0, 0, 1, 1], [], []>, precision = #tpu.contract_precision<fp32>} : vector<16x16xf32>, vector<16x128xf32>, vector<16x128xf32> -> vector<16x128xf32>
    %122 = vector.extract_strided_slice %115 {offsets = [48, 0], sizes = [16, 128], strides = [1, 1]} : vector<80x128xf32> to vector<16x128xf32>
    %cst_52 = arith.constant dense<0.000000e+00> : vector<16x128xf32>
    %123 = tpu.matmul %0, %122, %cst_52 {dimension_numbers = #tpu.dot_dimension_numbers<[1], [0], [0], [1], [0, 0, 1, 1], [], []>, precision = #tpu.contract_precision<fp32>} : vector<16x16xf32>, vector<16x128xf32>, vector<16x128xf32> -> vector<16x128xf32>
    %124 = vector.extract_strided_slice %115 {offsets = [64, 0], sizes = [16, 128], strides = [1, 1]} : vector<80x128xf32> to vector<16x128xf32>
    %cst_53 = arith.constant dense<0.000000e+00> : vector<16x128xf32>
    %125 = tpu.matmul %0, %124, %cst_53 {dimension_numbers = #tpu.dot_dimension_numbers<[1], [0], [0], [1], [0, 0, 1, 1], [], []>, precision = #tpu.contract_precision<fp32>} : vector<16x16xf32>, vector<16x128xf32>, vector<16x128xf32> -> vector<16x128xf32>
    %126 = arith.mulf %117, %117 : vector<16x128xf32>
    %127 = arith.mulf %119, %119 : vector<16x128xf32>
    %128 = arith.mulf %117, %119 : vector<16x128xf32>
    %129 = arith.subf %121, %126 : vector<16x128xf32>
    %130 = arith.subf %123, %127 : vector<16x128xf32>
    %131 = arith.subf %125, %128 : vector<16x128xf32>
    %cst_54 = arith.constant 2.000000e+00 : f32
    %132 = vector.broadcast %cst_54 : f32 to vector<16x128xf32>
    %133 = arith.mulf %132, %128 : vector<16x128xf32>
    %cst_55 = arith.constant 9.99999974E-5 : f32
    %134 = vector.broadcast %cst_55 : f32 to vector<16x128xf32>
    %135 = arith.addf %133, %134 : vector<16x128xf32>
    %cst_56 = arith.constant 2.000000e+00 : f32
    %136 = vector.broadcast %cst_56 : f32 to vector<16x128xf32>
    %137 = arith.mulf %136, %131 : vector<16x128xf32>
    %cst_57 = arith.constant 8.99999984E-4 : f32
    %138 = vector.broadcast %cst_57 : f32 to vector<16x128xf32>
    %139 = arith.addf %137, %138 : vector<16x128xf32>
    %140 = arith.mulf %135, %139 : vector<16x128xf32>
    %141 = arith.addf %126, %127 : vector<16x128xf32>
    %cst_58 = arith.constant 9.99999974E-5 : f32
    %142 = vector.broadcast %cst_58 : f32 to vector<16x128xf32>
    %143 = arith.addf %141, %142 : vector<16x128xf32>
    %144 = arith.addf %129, %130 : vector<16x128xf32>
    %cst_59 = arith.constant 8.99999984E-4 : f32
    %145 = vector.broadcast %cst_59 : f32 to vector<16x128xf32>
    %146 = arith.addf %144, %145 : vector<16x128xf32>
    %147 = arith.mulf %143, %146 : vector<16x128xf32>
    %148 = arith.divf %140, %147 : vector<16x128xf32>
    %149 = arith.mulf %148, %105 : vector<16x128xf32>
    %cst_60 = arith.constant 1.000000e+00 : f32
    %150 = vector.broadcast %cst_60 : f32 to vector<16x128xf32>
    %151 = arith.subf %150, %149 : vector<16x128xf32>
    %cst_61 = arith.constant 5.000000e-01 : f32
    %152 = vector.broadcast %cst_61 : f32 to vector<16x128xf32>
    %153 = arith.mulf %151, %152 : vector<16x128xf32>
    %cst_62 = arith.constant 0.000000e+00 : f32
    %cst_63 = arith.constant 1.000000e+00 : f32
    %154 = vector.broadcast %cst_62 : f32 to vector<16x128xf32>
    %155 = arith.maximumf %154, %153 : vector<16x128xf32>
    %156 = vector.broadcast %cst_63 : f32 to vector<16x128xf32>
    %157 = arith.minimumf %156, %155 : vector<16x128xf32>
    %158 = vector.shape_cast %157 : vector<16x128xf32> to vector<1x16x128xf32>
    %c0_64 = arith.constant 0 : index
    %c0_65 = arith.constant 0 : index
    %c0_66 = arith.constant 0 : index
    %159 = vector.load %arg5[%c0_64, %c0_65, %c0_66] : memref<1x16x128xf32, #tpu.memory_space<vmem>>, vector<1x16x128xf32>
    tpu.vector_store %arg5[%c0_64, %c0_65, %c0_66], %158 {strides = array<i32>} : memref<1x16x128xf32, #tpu.memory_space<vmem>>, vector<1x16x128xf32>,
    return
  }
  func.func @transform_0(%arg0: i32) -> (i32, i32) {
    %c0_i32 = arith.constant 0 : i32
    %c0_i32_0 = arith.constant 0 : i32
    %c0_i32_1 = arith.constant 0 : i32
    return %c0_i32, %c0_i32_0 : i32, i32
  }
  func.func @transform_1(%arg0: i32) -> (i32, i32) {
    %c0_i32 = arith.constant 0 : i32
    %c0_i32_0 = arith.constant 0 : i32
    %c0_i32_1 = arith.constant 0 : i32
    return %c0_i32, %c0_i32_0 : i32, i32
  }
  func.func @transform_2(%arg0: i32) -> (i32, i32, i32) {
    %c0_i32 = arith.constant 0 : i32
    %c0_i32_0 = arith.constant 0 : i32
    %c0_i32_1 = arith.constant 0 : i32
    return %arg0, %c0_i32, %c0_i32_0 : i32, i32, i32
  }
  func.func @transform_3(%arg0: i32) -> (i32, i32, i32) {
    %c0_i32 = arith.constant 0 : i32
    %c0_i32_0 = arith.constant 0 : i32
    %c0_i32_1 = arith.constant 0 : i32
    return %arg0, %c0_i32, %c0_i32_0 : i32, i32, i32
  }
  func.func @transform_4(%arg0: i32) -> (i32, i32, i32) {
    %c0_i32 = arith.constant 0 : i32
    %c0_i32_0 = arith.constant 0 : i32
    %c0_i32_1 = arith.constant 0 : i32
    return %arg0, %c0_i32, %c0_i32_0 : i32, i32, i32
  }
}

</mosaic_0001>

<llo_original>
// kernel: tpu_custom_call.1
$region0: #{tpu_custom_call.1}
  #allocation0 [shape = 'u32[]', space=smem, size = 0x4, offset = 0x4, fixed_abs, tag = 'smem constant byte address 0x4 - core index']
  #allocation1 [shape = 'u32[72,128]{1,0:T(1,128)}', space=vmem, size = 0x9000, scoped, tag = 'internal scratch']
  #allocation2 [shape = 'f32[80,128]{1,0:T(8,128)}', space=vmem, size = 0xa000, scoped, tag = 'scratch operand']
  %s0 = inlined_call_operand.hbm [shape: f32[16,16], index: 0, kind: input, shape index: {}]
  %s1 = inlined_call_operand.hbm [shape: f32[128,128], index: 1, kind: input, shape index: {}]
  %s2 = inlined_call_operand.hbm [shape: f32[1,16,128], index: 2, kind: input, shape index: {}]
  %s3 = inlined_call_operand.hbm [shape: f32[1,16,128], index: 3, kind: input, shape index: {}]
  %s4 = inlined_call_operand.hbm [shape: f32[1,16,128], index: 4, kind: output, shape index: {}]
  %s5 = sld [smem:[#allocation0]]
  $region42: #{tpu_custom_call.1} parent=0
    _
  %s7 = ssub.s32 1, %s5
  %s8 = scalar_select 0, %s7, %s5
  $region1: #{tpu_custom_call.1} parent=0
    #allocation3 [shape = 'u8[8192]{0}', space=vmem, size = 0x2000, scoped, tag = 'input window, operand 0, single buffered']
    #allocation4 [shape = 's32[1]{0}', space=sflag, size = 0x4, scoped, tag = 'scoped memory for tpu_custom_call.1']
    #allocation5 [shape = 's32[1]{0}', space=sflag, size = 0x4, scoped, tag = 'scoped memory for tpu_custom_call.1']
    #allocation6 [shape = 'u8[65536]{0}', space=vmem, size = 0x10000, scoped, tag = 'input window, operand 1, single buffered']
    #allocation7 [shape = 's32[1]{0}', space=sflag, size = 0x4, scoped, tag = 'scoped memory for tpu_custom_call.1']
    #allocation8 [shape = 'u8[8192]{0}', space=vmem, size = 0x2000, scoped, tag = 'input window, operand 2, single buffered']
    #allocation9 [shape = 'u8[8192]{0}', space=vmem, size = 0x2000, scoped, tag = 'input window, operand 3, single buffered']
    #allocation10 [shape = 's32[1]{0}', space=sflag, size = 0x4, scoped, tag = 'scoped memory for tpu_custom_call.1']
    #allocation11 [shape = 'u8[8192]{0}', space=vmem, size = 0x2000, scoped, tag = 'output window, operand 0, single buffered']
    %9 = vsyncpa [#allocation4], 0
    %10 = vsyncpa [#allocation7], 0
    %11 = vsyncpa [#allocation10], 0
    %12 = vsyncpa [#allocation5], 0
    // Predicated region
    $region2: #{tpu_custom_call.1} parent=1 // pred_check
      _
    $region3: #{tpu_custom_call.1} parent=1 // pred_check_branch
      %14 = sbr.rel (0) target = $region5
    $region4: #{tpu_custom_call.1} parent=1 // pred_region
      %16 = vsyncadd [#allocation4], 0
      %s17 = sshll.u32 %s0, 4
      %s18 = int_to_ptr.hbm [resolvable:$true] %s17
      %s19 = sshll.u32 [#allocation3], 4
      %s20 = int_to_ptr.vmem [resolvable:$true] %s19
      %25 = dma.hbm_to_vmem [thread:$0]  %s18, 256, %s20, [#allocation4], 128, 128, 8
    $region5: #{tpu_custom_call.1} parent=1 // pred_fallthru
      _
    // Predicated region
    $region6: #{tpu_custom_call.1} parent=1 // pred_check
      _
    $region7: #{tpu_custom_call.1} parent=1 // pred_check_branch
      %27 = sbr.rel (0) target = $region9
    $region8: #{tpu_custom_call.1} parent=1 // pred_region
      %29 = vsyncadd [#allocation7], 0
      %s30 = sshll.u32 %s1, 4
      %s31 = int_to_ptr.hbm [resolvable:$true] %s30
      %s32 = sshll.u32 [#allocation6], 4
      %s33 = int_to_ptr.vmem [resolvable:$true] %s32
      %38 = dma.hbm_to_vmem [thread:$0]  %s31, 2048, %s33, [#allocation7], 128, 128, 8
    $region9: #{tpu_custom_call.1} parent=1 // pred_fallthru
      _
    // Predicated region
    $region10: #{tpu_custom_call.1} parent=1 // pred_check
      _
    $region11: #{tpu_custom_call.1} parent=1 // pred_check_branch
      %40 = sbr.rel (0) target = $region13
    $region12: #{tpu_custom_call.1} parent=1 // pred_region
      %42 = vsyncadd [#allocation7], 0
      %s43 = sshll.u32 %s2, 4
      %s44 = int_to_ptr.hbm [resolvable:$true] %s43
      %s45 = sshll.u32 [#allocation8], 4
      %s46 = int_to_ptr.vmem [resolvable:$true] %s45
      %51 = dma.hbm_to_vmem [thread:$0]  %s44, 256, %s46, [#allocation7], 128, 128, 8
    $region13: #{tpu_custom_call.1} parent=1 // pred_fallthru
      _
    // Predicated region
    $region14: #{tpu_custom_call.1} parent=1 // pred_check
      _
    $region15: #{tpu_custom_call.1} parent=1 // pred_check_branch
      %53 = sbr.rel (0) target = $region17
    $region16: #{tpu_custom_call.1} parent=1 // pred_region
      %55 = vsyncadd [#allocation10], 0
      %s56 = sshll.u32 %s3, 4
      %s57 = int_to_ptr.hbm [resolvable:$true] %s56
      %s58 = sshll.u32 [#allocation9], 4
      %s59 = int_to_ptr.vmem [resolvable:$true] %s58
      %64 = dma.hbm_to_vmem [thread:$0]  %s57, 256, %s59, [#allocation10], 128, 128, 8
    $region17: #{tpu_custom_call.1} parent=1 // pred_fallthru
      _
    // Predicated region
    $region18: #{tpu_custom_call.1} parent=1 // pred_check
      _
    $region19: #{tpu_custom_call.1} parent=1 // pred_check_branch
      %66 = sbr.rel (0) target = $region21
    $region20: #{tpu_custom_call.1} parent=1 // pred_region
      %68 = dma.done [#allocation4], 256
    $region21: #{tpu_custom_call.1} parent=1 // pred_fallthru
      _
    // Predicated region
    $region22: #{tpu_custom_call.1} parent=1 // pred_check
      _
    $region23: #{tpu_custom_call.1} parent=1 // pred_check_branch
      %70 = sbr.rel (0) target = $region25
    $region24: #{tpu_custom_call.1} parent=1 // pred_region
      %72 = dma.done [#allocation7], 2048
    $region25: #{tpu_custom_call.1} parent=1 // pred_fallthru
      _
    // Predicated region
    $region26: #{tpu_custom_call.1} parent=1 // pred_check
      _
    $region27: #{tpu_custom_call.1} parent=1 // pred_check_branch
      %74 = sbr.rel (0) target = $region29
    $region28: #{tpu_custom_call.1} parent=1 // pred_region
      %76 = dma.done [#allocation7], 256
    $region29: #{tpu_custom_call.1} parent=1 // pred_fallthru
      _
    // Predicated region
    $region30: #{tpu_custom_call.1} parent=1 // pred_check
      _
    $region31: #{tpu_custom_call.1} parent=1 // pred_check_branch
      %78 = sbr.rel (0) target = $region33
    $region32: #{tpu_custom_call.1} parent=1 // pred_region
      %80 = dma.done [#allocation10], 256
    $region33: #{tpu_custom_call.1} parent=1 // pred_fallthru
      _
    %v82 = vld [vmem:[#allocation3] sm:$0xff]
    %v83 = vld [vmem:[#allocation3 + $0x8] sm:$0xff]
    %v84 = vld [vmem:[#allocation6] sm:$0xff]
    %v85 = vld [vmem:[#allocation6 + $0x8] sm:$0xff]
    %v86 = vld [vmem:[#allocation6 + $0x10] sm:$0xff]
    %v87 = vld [vmem:[#allocation6 + $0x18] sm:$0xff]
    %v88 = vld [vmem:[#allocation6 + $0x20] sm:$0xff]
    %v89 = vld [vmem:[#allocation6 + $0x28] sm:$0xff]
    %v90 = vld [vmem:[#allocation6 + $0x30] sm:$0xff]
    %v91 = vld [vmem:[#allocation6 + $0x38] sm:$0xff]
    %v92 = vld [vmem:[#allocation6 + $0x40] sm:$0xff]
    %v93 = vld [vmem:[#allocation6 + $0x48] sm:$0xff]
    %v94 = vld [vmem:[#allocation6 + $0x50] sm:$0xff]
    %v95 = vld [vmem:[#allocation6 + $0x58] sm:$0xff]
    %v96 = vld [vmem:[#allocation6 + $0x60] sm:$0xff]
    %v97 = vld [vmem:[#allocation6 + $0x68] sm:$0xff]
    %v98 = vld [vmem:[#allocation6 + $0x70] sm:$0xff]
    %v99 = vld [vmem:[#allocation6 + $0x78] sm:$0xff]
    %v100 = vld [vmem:[#allocation8] sm:$0xff]
    %v101 = vld [vmem:[#allocation8 + $0x8] sm:$0xff]
    %v102 = vld [vmem:[#allocation9] sm:$0xff]
    %v103 = vld [vmem:[#allocation9 + $0x8] sm:$0xff]
    %v104 = vpack.c.bf16 %v84, %v84
    %v105 = vpack.c.bf16 %v85, %v85
    %v106 = vpack.c.bf16 %v86, %v86
    %v107 = vpack.c.bf16 %v87, %v87
    %v108 = vpack.c.bf16 %v88, %v88
    %v109 = vpack.c.bf16 %v89, %v89
    %v110 = vpack.c.bf16 %v90, %v90
    %v111 = vpack.c.bf16 %v91, %v91
    %v112 = vpack.c.bf16 %v92, %v92
    %v113 = vpack.c.bf16 %v93, %v93
    %v114 = vpack.c.bf16 %v94, %v94
    %v115 = vpack.c.bf16 %v95, %v95
    %v116 = vpack.c.bf16 %v96, %v96
    %v117 = vpack.c.bf16 %v97, %v97
    %v118 = vpack.c.bf16 %v98, %v98
    %v119 = vpack.c.bf16 %v99, %v99
    %v120 = vunpack.c.l.bf16 %v104
    %v121 = vunpack.c.l.bf16 %v105
    %v122 = vunpack.c.l.bf16 %v106
    %v123 = vunpack.c.l.bf16 %v107
    %v124 = vunpack.c.l.bf16 %v108
    %v125 = vunpack.c.l.bf16 %v109
    %v126 = vunpack.c.l.bf16 %v110
    %v127 = vunpack.c.l.bf16 %v111
    %v128 = vunpack.c.l.bf16 %v112
    %v129 = vunpack.c.l.bf16 %v113
    %v130 = vunpack.c.l.bf16 %v114
    %v131 = vunpack.c.l.bf16 %v115
    %v132 = vunpack.c.l.bf16 %v116
    %v133 = vunpack.c.l.bf16 %v117
    %v134 = vunpack.c.l.bf16 %v118
    %v135 = vunpack.c.l.bf16 %v119
    %v136 = vsub.f32 %v84, %v120
    %v137 = vsub.f32 %v85, %v121
    %v138 = vsub.f32 %v86, %v122
    %v139 = vsub.f32 %v87, %v123
    %v140 = vsub.f32 %v88, %v124
    %v141 = vsub.f32 %v89, %v125
    %v142 = vsub.f32 %v90, %v126
    %v143 = vsub.f32 %v91, %v127
    %v144 = vsub.f32 %v92, %v128
    %v145 = vsub.f32 %v93, %v129
    %v146 = vsub.f32 %v94, %v130
    %v147 = vsub.f32 %v95, %v131
    %v148 = vsub.f32 %v96, %v132
    %v149 = vsub.f32 %v97, %v133
    %v150 = vsub.f32 %v98, %v134
    %v151 = vsub.f32 %v99, %v135
    %v152 = vpack.c.bf16 %v137, %v136
    %v153 = vpack.c.bf16 %v139, %v138
    %v154 = vpack.c.bf16 %v141, %v140
    %v155 = vpack.c.bf16 %v143, %v142
    %v156 = vpack.c.bf16 %v145, %v144
    %v157 = vpack.c.bf16 %v147, %v146
    %v158 = vpack.c.bf16 %v149, %v148
    %v159 = vpack.c.bf16 %v151, %v150
    %v160 = vpack.c.bf16 %v82, %v82
    %v161 = vpack.c.bf16 %v83, %v83
    %v162 = vunpack.c.l.bf16 %v160
    %v163 = vunpack.c.l.bf16 %v161
    %v164 = vsub.f32 %v82, %v162
    %v165 = vsub.f32 %v83, %v163
    %v166 = vpack.c.bf16 %v165, %v164
    %vm167 = vcmp.gt.f32.partialorder %v100, 0.0
    %vm168 = vcmp.gt.f32.partialorder %v101, 0.0
    %vm169 = vcmp.gt.f32.partialorder %v102, 0.0
    %vm170 = vcmp.gt.f32.partialorder %v103, 0.0
    %vm171 = vmand %vm167, %vm169
    %vm172 = vmand %vm168, %vm170
    %v173 = vsel %vm171, 1, 0
    %v174 = vsel %vm172, 1, 0
    %v175 = vcvt.s32.f32 %v173
    %v176 = vcvt.s32.f32 %v174
    %v177 = vpack.c.bf16 %v176, %v175
    %178 = vmatpush.bf16.msra.mxu0 %v159
    %179 = vmatpush.bf16.msra.mxu0 %v158
    %180 = vmatpush.bf16.msra.mxu0 %v157
    %181 = vmatpush.bf16.msra.mxu0 %v156
    %182 = vmatpush.bf16.msra.mxu0 %v155
    %183 = vmatpush.bf16.msra.mxu0 %v154
    %184 = vmatpush.bf16.msra.mxu0 %v153
    %185 = vmatpush.bf16.msra.mxu0 %v152
    %186 = vmatmul.bf16.gmra.mxu0 %v177
    %v187 = vpop.f32.mrf.mxu0
    %v188 = vadd.f32 0.0, %v187
    %v189 = vpop.f32.mrf.mxu0
    %v190 = vadd.f32 0.0, %v189
    %191 = vdwg.mxu0
    %v208 = vunpack.c.l.b16 %v104
    %v209 = vunpack.c.l.b16 %v105
    %v210 = vunpack.c.l.b16 %v106
    %v211 = vunpack.c.l.b16 %v107
    %v212 = vunpack.c.l.b16 %v108
    %v213 = vunpack.c.l.b16 %v109
    %v214 = vunpack.c.l.b16 %v110
    %v215 = vunpack.c.l.b16 %v111
    %v216 = vunpack.c.l.b16 %v112
    %v217 = vunpack.c.l.b16 %v113
    %v218 = vunpack.c.l.b16 %v114
    %v219 = vunpack.c.l.b16 %v115
    %v220 = vunpack.c.l.b16 %v116
    %v221 = vunpack.c.l.b16 %v117
    %v222 = vunpack.c.l.b16 %v118
    %v223 = vunpack.c.l.b16 %v119
    %v224 = vpack.c.b16 %v209, %v208
    %v225 = vpack.c.b16 %v211, %v210
    %v226 = vpack.c.b16 %v213, %v212
    %v227 = vpack.c.b16 %v215, %v214
    %v228 = vpack.c.b16 %v217, %v216
    %v229 = vpack.c.b16 %v219, %v218
    %v230 = vpack.c.b16 %v221, %v220
    %v231 = vpack.c.b16 %v223, %v222
    %240 = vmatpush.bf16.msra.mxu0 %v231
    %241 = vmatpush.bf16.msra.mxu0 %v230
    %242 = vmatpush.bf16.msra.mxu0 %v229
    %243 = vmatpush.bf16.msra.mxu0 %v228
    %244 = vmatpush.bf16.msra.mxu0 %v227
    %245 = vmatpush.bf16.msra.mxu0 %v226
    %246 = vmatpush.bf16.msra.mxu0 %v225
    %247 = vmatpush.bf16.msra.mxu0 %v224
    %248 = vmatmul.bf16.gmra.mxu0 %v177
    %v249 = vpop.f32.mrf.mxu0
    %v250 = vadd.f32 %v188, %v249
    %v251 = vpop.f32.mrf.mxu0
    %v252 = vadd.f32 %v190, %v251
    %253 = vdwg.mxu0
    %v254 = vpack.c.bf16 %v250, %v250
    %v255 = vpack.c.bf16 %v252, %v252
    %v256 = vunpack.c.l.bf16 %v254
    %v257 = vunpack.c.l.bf16 %v255
    %v258 = vsub.f32 %v250, %v256
    %v259 = vsub.f32 %v252, %v257
    %v260 = vpack.c.bf16 %v259, %v258
    %v263 = vunpack.c.l.b16 %v254
    %v264 = vunpack.c.l.b16 %v255
    %v265 = vpack.c.b16 %v264, %v263
    %vm267 = vcmask 130048
    %v269 = vsel %vm267, %v166, 0
    %271 = vmatpush.bf16.msra.mxu0 0
    %272 = vmatpush.bf16.msra.mxu0 0
    %273 = vmatpush.bf16.msra.mxu0 0
    %274 = vmatpush.bf16.msra.mxu0 0
    %275 = vmatpush.bf16.msra.mxu0 0
    %276 = vmatpush.bf16.msra.mxu0 0
    %277 = vmatpush.bf16.msra.mxu0 0
    %278 = vmatpush.bf16.msra.mxu0 %v265
    %279 = vmatmul.bf16.gmra.mxu0 %v269
    %v280 = vpop.f32.mrf.mxu0
    %v281 = vadd.f32 0.0, %v280
    %v282 = vpop.f32.mrf.mxu0
    %v283 = vadd.f32 0.0, %v282
    %284 = vdwg.mxu0
    %v287 = vunpack.c.l.b16 %v160
    %v288 = vunpack.c.l.b16 %v161
    %v289 = vpack.c.b16 %v288, %v287
    %v291 = vsel %vm267, %v289, 0
    %293 = vmatpush.bf16.msra.mxu0 0
    %294 = vmatpush.bf16.msra.mxu0 0
    %295 = vmatpush.bf16.msra.mxu0 0
    %296 = vmatpush.bf16.msra.mxu0 0
    %297 = vmatpush.bf16.msra.mxu0 0
    %298 = vmatpush.bf16.msra.mxu0 0
    %299 = vmatpush.bf16.msra.mxu0 0
    %300 = vmatpush.bf16.msra.mxu0 %v265
    %301 = vmatmul.bf16.gmra.mxu0 %v291
    %v302 = vpop.f32.mrf.mxu0
    %v303 = vadd.f32 %v281, %v302
    %v304 = vpop.f32.mrf.mxu0
    %v305 = vadd.f32 %v283, %v304
    %306 = vdwg.mxu0
    %307 = vmatpush.bf16.msra.mxu0 0
    %308 = vmatpush.bf16.msra.mxu0 0
    %309 = vmatpush.bf16.msra.mxu0 0
    %310 = vmatpush.bf16.msra.mxu0 0
    %311 = vmatpush.bf16.msra.mxu0 0
    %312 = vmatpush.bf16.msra.mxu0 0
    %313 = vmatpush.bf16.msra.mxu0 0
    %314 = vmatpush.bf16.msra.mxu0 %v260
    %315 = vmatmul.bf16.gmra.mxu0 %v291
    %v316 = vpop.f32.mrf.mxu0
    %v317 = vadd.f32 0.0, %v316
    %v318 = vpop.f32.mrf.mxu0
    %v319 = vadd.f32 0.0, %v318
    %320 = vdwg.mxu0
    %v321 = vadd.f32 %v303, %v317
    %v322 = vadd.f32 %v305, %v319
    %vm323 = vcmp.gt.f32.partialorder %v321, 0.8
    %vm324 = vcmp.gt.f32.partialorder %v322, 0.8
    %v325 = vsel %vm323, 1, 0
    %v326 = vsel %vm324, 1, 0
    %v327 = vcvt.s32.f32 %v325
    %v328 = vcvt.s32.f32 %v326
    %v329 = vpack.c.bf16 %v328, %v327
    %330 = vmatpush.bf16.msra.mxu0 %v159
    %331 = vmatpush.bf16.msra.mxu0 %v158
    %332 = vmatpush.bf16.msra.mxu0 %v157
    %333 = vmatpush.bf16.msra.mxu0 %v156
    %334 = vmatpush.bf16.msra.mxu0 %v155
    %335 = vmatpush.bf16.msra.mxu0 %v154
    %336 = vmatpush.bf16.msra.mxu0 %v153
    %337 = vmatpush.bf16.msra.mxu0 %v152
    %338 = vmatmul.bf16.gmra.mxu0 %v329
    %v339 = vpop.f32.mrf.mxu0
    %v340 = vadd.f32 0.0, %v339
    %v341 = vpop.f32.mrf.mxu0
    %v342 = vadd.f32 0.0, %v341
    %343 = vdwg.mxu0
    %344 = vmatpush.bf16.msra.mxu0 %v231
    %345 = vmatpush.bf16.msra.mxu0 %v230
    %346 = vmatpush.bf16.msra.mxu0 %v229
    %347 = vmatpush.bf16.msra.mxu0 %v228
    %348 = vmatpush.bf16.msra.mxu0 %v227
    %349 = vmatpush.bf16.msra.mxu0 %v226
    %350 = vmatpush.bf16.msra.mxu0 %v225
    %351 = vmatpush.bf16.msra.mxu0 %v224
    %352 = vmatmul.bf16.gmra.mxu0 %v329
    %v353 = vpop.f32.mrf.mxu0
    %v354 = vadd.f32 %v340, %v353
    %v355 = vpop.f32.mrf.mxu0
    %v356 = vadd.f32 %v342, %v355
    %357 = vdwg.mxu0
    %v358 = vpack.c.bf16 %v354, %v354
    %v359 = vpack.c.bf16 %v356, %v356
    %v360 = vunpack.c.l.bf16 %v358
    %v361 = vunpack.c.l.bf16 %v359
    %v362 = vsub.f32 %v354, %v360
    %v363 = vsub.f32 %v356, %v361
    %v364 = vpack.c.bf16 %v363, %v362
    %v367 = vunpack.c.l.b16 %v358
    %v368 = vunpack.c.l.b16 %v359
    %v369 = vpack.c.b16 %v368, %v367
    %371 = vmatpush.bf16.msra.mxu0 0
    %372 = vmatpush.bf16.msra.mxu0 0
    %373 = vmatpush.bf16.msra.mxu0 0
    %374 = vmatpush.bf16.msra.mxu0 0
    %375 = vmatpush.bf16.msra.mxu0 0
    %376 = vmatpush.bf16.msra.mxu0 0
    %377 = vmatpush.bf16.msra.mxu0 0
    %378 = vmatpush.bf16.msra.mxu0 %v369
    %379 = vmatmul.bf16.gmra.mxu0 %v269
    %v380 = vpop.f32.mrf.mxu0
    %v381 = vadd.f32 0.0, %v380
    %v382 = vpop.f32.mrf.mxu0
    %v383 = vadd.f32 0.0, %v382
    %384 = vdwg.mxu0
    %385 = vmatpush.bf16.msra.mxu0 0
    %386 = vmatpush.bf16.msra.mxu0 0
    %387 = vmatpush.bf16.msra.mxu0 0
    %388 = vmatpush.bf16.msra.mxu0 0
    %389 = vmatpush.bf16.msra.mxu0 0
    %390 = vmatpush.bf16.msra.mxu0 0
    %391 = vmatpush.bf16.msra.mxu0 0
    %392 = vmatpush.bf16.msra.mxu0 %v369
    %393 = vmatmul.bf16.gmra.mxu0 %v291
    %v394 = vpop.f32.mrf.mxu0
    %v395 = vadd.f32 %v381, %v394
    %v396 = vpop.f32.mrf.mxu0
    %v397 = vadd.f32 %v383, %v396
    %398 = vdwg.mxu0
    %399 = vmatpush.bf16.msra.mxu0 0
    %400 = vmatpush.bf16.msra.mxu0 0
    %401 = vmatpush.bf16.msra.mxu0 0
    %402 = vmatpush.bf16.msra.mxu0 0
    %403 = vmatpush.bf16.msra.mxu0 0
    %404 = vmatpush.bf16.msra.mxu0 0
    %405 = vmatpush.bf16.msra.mxu0 0
    %406 = vmatpush.bf16.msra.mxu0 %v364
    %407 = vmatmul.bf16.gmra.mxu0 %v291
    %v408 = vpop.f32.mrf.mxu0
    %v409 = vadd.f32 0.0, %v408
    %v410 = vpop.f32.mrf.mxu0
    %v411 = vadd.f32 0.0, %v410
    %412 = vdwg.mxu0
    %v413 = vadd.f32 %v395, %v409
    %v414 = vadd.f32 %v397, %v411
    %vm415 = vcmp.gt.f32.partialorder %v413, 0.8
    %vm416 = vcmp.gt.f32.partialorder %v414, 0.8
    %v417 = vsel %vm415, 1, 0
    %v418 = vsel %vm416, 1, 0
    %v419 = vcvt.s32.f32 %v417
    %v420 = vcvt.s32.f32 %v418
    %v421 = vpack.c.bf16 %v420, %v419
    %422 = vmatpush.bf16.msra.mxu0 %v159
    %423 = vmatpush.bf16.msra.mxu0 %v158
    %424 = vmatpush.bf16.msra.mxu0 %v157
    %425 = vmatpush.bf16.msra.mxu0 %v156
    %426 = vmatpush.bf16.msra.mxu0 %v155
    %427 = vmatpush.bf16.msra.mxu0 %v154
    %428 = vmatpush.bf16.msra.mxu0 %v153
    %429 = vmatpush.bf16.msra.mxu0 %v152
    %430 = vmatmul.bf16.gmra.mxu0 %v421
    %v431 = vpop.f32.mrf.mxu0
    %v432 = vadd.f32 0.0, %v431
    %v433 = vpop.f32.mrf.mxu0
    %v434 = vadd.f32 0.0, %v433
    %435 = vdwg.mxu0
    %436 = vmatpush.bf16.msra.mxu0 %v231
    %437 = vmatpush.bf16.msra.mxu0 %v230
    %438 = vmatpush.bf16.msra.mxu0 %v229
    %439 = vmatpush.bf16.msra.mxu0 %v228
    %440 = vmatpush.bf16.msra.mxu0 %v227
    %441 = vmatpush.bf16.msra.mxu0 %v226
    %442 = vmatpush.bf16.msra.mxu0 %v225
    %443 = vmatpush.bf16.msra.mxu0 %v224
    %444 = vmatmul.bf16.gmra.mxu0 %v421
    %v445 = vpop.f32.mrf.mxu0
    %v446 = vadd.f32 %v432, %v445
    %v447 = vpop.f32.mrf.mxu0
    %v448 = vadd.f32 %v434, %v447
    %449 = vdwg.mxu0
    %v450 = vpack.c.bf16 %v446, %v446
    %v451 = vpack.c.bf16 %v448, %v448
    %v452 = vunpack.c.l.bf16 %v450
    %v453 = vunpack.c.l.bf16 %v451
    %v454 = vsub.f32 %v446, %v452
    %v455 = vsub.f32 %v448, %v453
    %v456 = vpack.c.bf16 %v455, %v454
    %v459 = vunpack.c.l.b16 %v450
    %v460 = vunpack.c.l.b16 %v451
    %v461 = vpack.c.b16 %v460, %v459
    %463 = vmatpush.bf16.msra.mxu0 0
    %464 = vmatpush.bf16.msra.mxu0 0
    %465 = vmatpush.bf16.msra.mxu0 0
    %466 = vmatpush.bf16.msra.mxu0 0
    %467 = vmatpush.bf16.msra.mxu0 0
    %468 = vmatpush.bf16.msra.mxu0 0
    %469 = vmatpush.bf16.msra.mxu0 0
    %470 = vmatpush.bf16.msra.mxu0 %v461
    %471 = vmatmul.bf16.gmra.mxu0 %v269
    %v472 = vpop.f32.mrf.mxu0
    %v473 = vadd.f32 0.0, %v472
    %v474 = vpop.f32.mrf.mxu0
    %v475 = vadd.f32 0.0, %v474
    %476 = vdwg.mxu0
    %477 = vmatpush.bf16.msra.mxu0 0
    %478 = vmatpush.bf16.msra.mxu0 0
    %479 = vmatpush.bf16.msra.mxu0 0
    %480 = vmatpush.bf16.msra.mxu0 0
    %481 = vmatpush.bf16.msra.mxu0 0
    %482 = vmatpush.bf16.msra.mxu0 0
    %483 = vmatpush.bf16.msra.mxu0 0
    %484 = vmatpush.bf16.msra.mxu0 %v461
    %485 = vmatmul.bf16.gmra.mxu0 %v291
    %v486 = vpop.f32.mrf.mxu0
    %v487 = vadd.f32 %v473, %v486
    %v488 = vpop.f32.mrf.mxu0
    %v489 = vadd.f32 %v475, %v488
    %490 = vdwg.mxu0
    %491 = vmatpush.bf16.msra.mxu0 0
    %492 = vmatpush.bf16.msra.mxu0 0
    %493 = vmatpush.bf16.msra.mxu0 0
    %494 = vmatpush.bf16.msra.mxu0 0
    %495 = vmatpush.bf16.msra.mxu0 0
    %496 = vmatpush.bf16.msra.mxu0 0
    %497 = vmatpush.bf16.msra.mxu0 0
    %498 = vmatpush.bf16.msra.mxu0 %v456
    %499 = vmatmul.bf16.gmra.mxu0 %v291
    %v500 = vpop.f32.mrf.mxu0
    %v501 = vadd.f32 0.0, %v500
    %v502 = vpop.f32.mrf.mxu0
    %v503 = vadd.f32 0.0, %v502
    %504 = vdwg.mxu0
    %v505 = vadd.f32 %v487, %v501
    %v506 = vadd.f32 %v489, %v503
    %vm507 = vcmp.gt.f32.partialorder %v505, 0.8
    %vm508 = vcmp.gt.f32.partialorder %v506, 0.8
    %v509 = vsel %vm507, 1, 0
    %v510 = vsel %vm508, 1, 0
    %v511 = vcvt.s32.f32 %v509
    %v512 = vcvt.s32.f32 %v510
    %v513 = vpack.c.bf16 %v512, %v511
    %514 = vmatpush.bf16.msra.mxu0 %v159
    %515 = vmatpush.bf16.msra.mxu0 %v158
    %516 = vmatpush.bf16.msra.mxu0 %v157
    %517 = vmatpush.bf16.msra.mxu0 %v156
    %518 = vmatpush.bf16.msra.mxu0 %v155
    %519 = vmatpush.bf16.msra.mxu0 %v154
    %520 = vmatpush.bf16.msra.mxu0 %v153
    %521 = vmatpush.bf16.msra.mxu0 %v152
    %522 = vmatmul.bf16.gmra.mxu0 %v513
    %v523 = vpop.f32.mrf.mxu0
    %v524 = vadd.f32 0.0, %v523
    %v525 = vpop.f32.mrf.mxu0
    %v526 = vadd.f32 0.0, %v525
    %527 = vdwg.mxu0
    %528 = vmatpush.bf16.msra.mxu0 %v231
    %529 = vmatpush.bf16.msra.mxu0 %v230
    %530 = vmatpush.bf16.msra.mxu0 %v229
    %531 = vmatpush.bf16.msra.mxu0 %v228
    %532 = vmatpush.bf16.msra.mxu0 %v227
    %533 = vmatpush.bf16.msra.mxu0 %v226
    %534 = vmatpush.bf16.msra.mxu0 %v225
    %535 = vmatpush.bf16.msra.mxu0 %v224
    %536 = vmatmul.bf16.gmra.mxu0 %v513
    %v537 = vpop.f32.mrf.mxu0
    %v538 = vadd.f32 %v524, %v537
    %v539 = vpop.f32.mrf.mxu0
    %v540 = vadd.f32 %v526, %v539
    %541 = vdwg.mxu0
    %v542 = vpack.c.bf16 %v538, %v538
    %v543 = vpack.c.bf16 %v540, %v540
    %v544 = vunpack.c.l.bf16 %v542
    %v545 = vunpack.c.l.bf16 %v543
    %v546 = vsub.f32 %v538, %v544
    %v547 = vsub.f32 %v540, %v545
    %v548 = vpack.c.bf16 %v547, %v546
    %v551 = vunpack.c.l.b16 %v542
    %v552 = vunpack.c.l.b16 %v543
    %v553 = vpack.c.b16 %v552, %v551
    %555 = vmatpush.bf16.msra.mxu0 0
    %556 = vmatpush.bf16.msra.mxu0 0
    %557 = vmatpush.bf16.msra.mxu0 0
    %558 = vmatpush.bf16.msra.mxu0 0
    %559 = vmatpush.bf16.msra.mxu0 0
    %560 = vmatpush.bf16.msra.mxu0 0
    %561 = vmatpush.bf16.msra.mxu0 0
    %562 = vmatpush.bf16.msra.mxu0 %v553
    %563 = vmatmul.bf16.gmra.mxu0 %v269
    %v564 = vpop.f32.mrf.mxu0
    %v565 = vadd.f32 0.0, %v564
    %v566 = vpop.f32.mrf.mxu0
    %v567 = vadd.f32 0.0, %v566
    %568 = vdwg.mxu0
    %569 = vmatpush.bf16.msra.mxu0 0
    %570 = vmatpush.bf16.msra.mxu0 0
    %571 = vmatpush.bf16.msra.mxu0 0
    %572 = vmatpush.bf16.msra.mxu0 0
    %573 = vmatpush.bf16.msra.mxu0 0
    %574 = vmatpush.bf16.msra.mxu0 0
    %575 = vmatpush.bf16.msra.mxu0 0
    %576 = vmatpush.bf16.msra.mxu0 %v553
    %577 = vmatmul.bf16.gmra.mxu0 %v291
    %v578 = vpop.f32.mrf.mxu0
    %v579 = vadd.f32 %v565, %v578
    %v580 = vpop.f32.mrf.mxu0
    %v581 = vadd.f32 %v567, %v580
    %582 = vdwg.mxu0
    %583 = vmatpush.bf16.msra.mxu0 0
    %584 = vmatpush.bf16.msra.mxu0 0
    %585 = vmatpush.bf16.msra.mxu0 0
    %586 = vmatpush.bf16.msra.mxu0 0
    %587 = vmatpush.bf16.msra.mxu0 0
    %588 = vmatpush.bf16.msra.mxu0 0
    %589 = vmatpush.bf16.msra.mxu0 0
    %590 = vmatpush.bf16.msra.mxu0 %v548
    %591 = vmatmul.bf16.gmra.mxu0 %v291
    %v592 = vpop.f32.mrf.mxu0
    %v593 = vadd.f32 0.0, %v592
    %v594 = vpop.f32.mrf.mxu0
    %v595 = vadd.f32 0.0, %v594
    %596 = vdwg.mxu0
    %v597 = vadd.f32 %v579, %v593
    %v598 = vadd.f32 %v581, %v595
    %vm599 = vcmp.gt.f32.partialorder %v597, 0.8
    %vm600 = vcmp.gt.f32.partialorder %v598, 0.8
    %v601 = vsel %vm599, 1, 0
    %v602 = vsel %vm600, 1, 0
    %v603 = vcvt.s32.f32 %v601
    %v604 = vcvt.s32.f32 %v602
    %v605 = vpack.c.bf16 %v604, %v603
    %606 = vmatpush.bf16.msra.mxu0 %v159
    %607 = vmatpush.bf16.msra.mxu0 %v158
    %608 = vmatpush.bf16.msra.mxu0 %v157
    %609 = vmatpush.bf16.msra.mxu0 %v156
    %610 = vmatpush.bf16.msra.mxu0 %v155
    %611 = vmatpush.bf16.msra.mxu0 %v154
    %612 = vmatpush.bf16.msra.mxu0 %v153
    %613 = vmatpush.bf16.msra.mxu0 %v152
    %614 = vmatmul.bf16.gmra.mxu0 %v605
    %v615 = vpop.f32.mrf.mxu0
    %v616 = vadd.f32 0.0, %v615
    %v617 = vpop.f32.mrf.mxu0
    %v618 = vadd.f32 0.0, %v617
    %619 = vdwg.mxu0
    %620 = vmatpush.bf16.msra.mxu0 %v231
    %621 = vmatpush.bf16.msra.mxu0 %v230
    %622 = vmatpush.bf16.msra.mxu0 %v229
    %623 = vmatpush.bf16.msra.mxu0 %v228
    %624 = vmatpush.bf16.msra.mxu0 %v227
    %625 = vmatpush.bf16.msra.mxu0 %v226
    %626 = vmatpush.bf16.msra.mxu0 %v225
    %627 = vmatpush.bf16.msra.mxu0 %v224
    %628 = vmatmul.bf16.gmra.mxu0 %v605
    %v629 = vpop.f32.mrf.mxu0
    %v630 = vadd.f32 %v616, %v629
    %v631 = vpop.f32.mrf.mxu0
    %v632 = vadd.f32 %v618, %v631
    %633 = vdwg.mxu0
    %v634 = vpack.c.bf16 %v630, %v630
    %v635 = vpack.c.bf16 %v632, %v632
    %v636 = vunpack.c.l.bf16 %v634
    %v637 = vunpack.c.l.bf16 %v635
    %v638 = vsub.f32 %v630, %v636
    %v639 = vsub.f32 %v632, %v637
    %v640 = vpack.c.bf16 %v639, %v638
    %v643 = vunpack.c.l.b16 %v634
    %v644 = vunpack.c.l.b16 %v635
    %v645 = vpack.c.b16 %v644, %v643
    %647 = vmatpush.bf16.msra.mxu0 0
    %648 = vmatpush.bf16.msra.mxu0 0
    %649 = vmatpush.bf16.msra.mxu0 0
    %650 = vmatpush.bf16.msra.mxu0 0
    %651 = vmatpush.bf16.msra.mxu0 0
    %652 = vmatpush.bf16.msra.mxu0 0
    %653 = vmatpush.bf16.msra.mxu0 0
    %654 = vmatpush.bf16.msra.mxu0 %v645
    %655 = vmatmul.bf16.gmra.mxu0 %v269
    %v656 = vpop.f32.mrf.mxu0
    %v657 = vadd.f32 0.0, %v656
    %v658 = vpop.f32.mrf.mxu0
    %v659 = vadd.f32 0.0, %v658
    %660 = vdwg.mxu0
    %661 = vmatpush.bf16.msra.mxu0 0
    %662 = vmatpush.bf16.msra.mxu0 0
    %663 = vmatpush.bf16.msra.mxu0 0
    %664 = vmatpush.bf16.msra.mxu0 0
    %665 = vmatpush.bf16.msra.mxu0 0
    %666 = vmatpush.bf16.msra.mxu0 0
    %667 = vmatpush.bf16.msra.mxu0 0
    %668 = vmatpush.bf16.msra.mxu0 %v645
    %669 = vmatmul.bf16.gmra.mxu0 %v291
    %v670 = vpop.f32.mrf.mxu0
    %v671 = vadd.f32 %v657, %v670
    %v672 = vpop.f32.mrf.mxu0
    %v673 = vadd.f32 %v659, %v672
    %674 = vdwg.mxu0
    %675 = vmatpush.bf16.msra.mxu0 0
    %676 = vmatpush.bf16.msra.mxu0 0
    %677 = vmatpush.bf16.msra.mxu0 0
    %678 = vmatpush.bf16.msra.mxu0 0
    %679 = vmatpush.bf16.msra.mxu0 0
    %680 = vmatpush.bf16.msra.mxu0 0
    %681 = vmatpush.bf16.msra.mxu0 0
    %682 = vmatpush.bf16.msra.mxu0 %v640
    %683 = vmatmul.bf16.gmra.mxu0 %v291
    %v684 = vpop.f32.mrf.mxu0
    %v685 = vadd.f32 0.0, %v684
    %v686 = vpop.f32.mrf.mxu0
    %v687 = vadd.f32 0.0, %v686
    %688 = vdwg.mxu0
    %v689 = vadd.f32 %v671, %v685
    %v690 = vadd.f32 %v673, %v687
    %vm691 = vcmp.gt.f32.partialorder %v689, 0.8
    %vm692 = vcmp.gt.f32.partialorder %v690, 0.8
    %v693 = vsel %vm691, 1, 0
    %v694 = vsel %vm692, 1, 0
    %v695 = vcvt.s32.f32 %v693
    %v696 = vcvt.s32.f32 %v694
    %697 = vst [vmem:[#allocation2] sm:$0xff] %v100
    %698 = vst [vmem:[#allocation2 + $0x8] sm:$0xff] %v101
    %699 = vst [vmem:[#allocation2 + $0x10] sm:$0xff] %v102
    %700 = vst [vmem:[#allocation2 + $0x18] sm:$0xff] %v103
    %v701 = vmul.f32 %v100, %v100
    %v702 = vmul.f32 %v101, %v101
    %703 = vst [vmem:[#allocation2 + $0x20] sm:$0xff] %v701
    %704 = vst [vmem:[#allocation2 + $0x28] sm:$0xff] %v702
    %v705 = vmul.f32 %v102, %v102
    %v706 = vmul.f32 %v103, %v103
    %707 = vst [vmem:[#allocation2 + $0x30] sm:$0xff] %v705
    %708 = vst [vmem:[#allocation2 + $0x38] sm:$0xff] %v706
    %v709 = vmul.f32 %v100, %v102
    %v710 = vmul.f32 %v101, %v103
    %711 = vst [vmem:[#allocation2 + $0x40] sm:$0xff] %v709
    %712 = vst [vmem:[#allocation2 + $0x48] sm:$0xff] %v710
    %v713 = vld [vmem:[#allocation2] sm:$0xff]
    %v714 = vld [vmem:[#allocation2 + $0x8] sm:$0xff]
    %v715 = vld [vmem:[#allocation2 + $0x10] sm:$0xff]
    %v716 = vld [vmem:[#allocation2 + $0x18] sm:$0xff]
    %v717 = vld [vmem:[#allocation2 + $0x20] sm:$0xff]
    %v718 = vld [vmem:[#allocation2 + $0x28] sm:$0xff]
    %v719 = vld [vmem:[#allocation2 + $0x30] sm:$0xff]
    %v720 = vld [vmem:[#allocation2 + $0x38] sm:$0xff]
    %v721 = vld [vmem:[#allocation2 + $0x40] sm:$0xff]
    %v722 = vld [vmem:[#allocation2 + $0x48] sm:$0xff]
    %v723 = vand.u32 %v99, 4294901760
    %724 = vmatpush.msra.mxu0 %v723
    %v725 = vand.u32 %v98, 4294901760
    %726 = vmatpush.msra.mxu0 %v725
    %v727 = vand.u32 %v97, 4294901760
    %728 = vmatpush.msra.mxu0 %v727
    %v729 = vand.u32 %v96, 4294901760
    %730 = vmatpush.msra.mxu0 %v729
    %v731 = vand.u32 %v95, 4294901760
    %732 = vmatpush.msra.mxu0 %v731
    %v733 = vand.u32 %v94, 4294901760
    %734 = vmatpush.msra.mxu0 %v733
    %v735 = vand.u32 %v93, 4294901760
    %736 = vmatpush.msra.mxu0 %v735
    %v737 = vand.u32 %v92, 4294901760
    %738 = vmatpush.msra.mxu0 %v737
    %v739 = vand.u32 %v91, 4294901760
    %740 = vmatpush.msra.mxu0 %v739
    %v741 = vand.u32 %v90, 4294901760
    %742 = vmatpush.msra.mxu0 %v741
    %v743 = vand.u32 %v89, 4294901760
    %744 = vmatpush.msra.mxu0 %v743
    %v745 = vand.u32 %v88, 4294901760
    %746 = vmatpush.msra.mxu0 %v745
    %v747 = vand.u32 %v87, 4294901760
    %748 = vmatpush.msra.mxu0 %v747
    %v749 = vand.u32 %v86, 4294901760
    %750 = vmatpush.msra.mxu0 %v749
    %v751 = vand.u32 %v85, 4294901760
    %752 = vmatpush.msra.mxu0 %v751
    %v753 = vand.u32 %v84, 4294901760
    %754 = vmatpush.msra.mxu0 %v753
    %v755 = vand.u32 %v713, 4294901760
    %v756 = vsub.f32 %v713, %v755
    %v757 = vand.u32 %v756, 4294901760
    %v758 = vsub.f32 %v756, %v757
    %v759 = vand.u32 %v758, 4294901760
    %760 = vmatmul.f32.gmra.mxu0 %v759
    %v761 = vpop.f32.mrf.mxu0
    %v762 = vadd.f32 0.0, %v761
    %v763 = vand.u32 %v714, 4294901760
    %v764 = vsub.f32 %v714, %v763
    %v765 = vand.u32 %v764, 4294901760
    %v766 = vsub.f32 %v764, %v765
    %v767 = vand.u32 %v766, 4294901760
    %768 = vmatmul.f32.gmra.mxu0 %v767
    %v769 = vpop.f32.mrf.mxu0
    %v770 = vadd.f32 0.0, %v769
    %v771 = vand.u32 %v715, 4294901760
    %v772 = vsub.f32 %v715, %v771
    %v773 = vand.u32 %v772, 4294901760
    %v774 = vsub.f32 %v772, %v773
    %v775 = vand.u32 %v774, 4294901760
    %776 = vmatmul.f32.gmra.mxu0 %v775
    %v777 = vpop.f32.mrf.mxu0
    %v778 = vadd.f32 0.0, %v777
    %v779 = vand.u32 %v716, 4294901760
    %v780 = vsub.f32 %v716, %v779
    %v781 = vand.u32 %v780, 4294901760
    %v782 = vsub.f32 %v780, %v781
    %v783 = vand.u32 %v782, 4294901760
    %784 = vmatmul.f32.gmra.mxu0 %v783
    %v785 = vpop.f32.mrf.mxu0
    %v786 = vadd.f32 0.0, %v785
    %v787 = vand.u32 %v717, 4294901760
    %v788 = vsub.f32 %v717, %v787
    %v789 = vand.u32 %v788, 4294901760
    %v790 = vsub.f32 %v788, %v789
    %v791 = vand.u32 %v790, 4294901760
    %792 = vmatmul.f32.gmra.mxu0 %v791
    %v793 = vpop.f32.mrf.mxu0
    %v794 = vadd.f32 0.0, %v793
    %v795 = vand.u32 %v718, 4294901760
    %v796 = vsub.f32 %v718, %v795
    %v797 = vand.u32 %v796, 4294901760
    %v798 = vsub.f32 %v796, %v797
    %v799 = vand.u32 %v798, 4294901760
    %800 = vmatmul.f32.gmra.mxu0 %v799
    %v801 = vpop.f32.mrf.mxu0
    %v802 = vadd.f32 0.0, %v801
    %v803 = vand.u32 %v719, 4294901760
    %v804 = vsub.f32 %v719, %v803
    %v805 = vand.u32 %v804, 4294901760
    %v806 = vsub.f32 %v804, %v805
    %v807 = vand.u32 %v806, 4294901760
    %808 = vmatmul.f32.gmra.mxu0 %v807
    %v809 = vpop.f32.mrf.mxu0
    %v810 = vadd.f32 0.0, %v809
    %v811 = vand.u32 %v720, 4294901760
    %v812 = vsub.f32 %v720, %v811
    %v813 = vand.u32 %v812, 4294901760
    %v814 = vsub.f32 %v812, %v813
    %v815 = vand.u32 %v814, 4294901760
    %816 = vmatmul.f32.gmra.mxu0 %v815
    %v817 = vpop.f32.mrf.mxu0
    %v818 = vadd.f32 0.0, %v817
    %v819 = vand.u32 %v721, 4294901760
    %v820 = vsub.f32 %v721, %v819
    %v821 = vand.u32 %v820, 4294901760
    %v822 = vsub.f32 %v820, %v821
    %v823 = vand.u32 %v822, 4294901760
    %824 = vmatmul.f32.gmra.mxu0 %v823
    %v825 = vpop.f32.mrf.mxu0
    %v826 = vadd.f32 0.0, %v825
    %v827 = vand.u32 %v722, 4294901760
    %v828 = vsub.f32 %v722, %v827
    %v829 = vand.u32 %v828, 4294901760
    %v830 = vsub.f32 %v828, %v829
    %v831 = vand.u32 %v830, 4294901760
    %832 = vmatmul.f32.gmra.mxu0 %v831
    %v833 = vpop.f32.mrf.mxu0
    %v834 = vadd.f32 0.0, %v833
    %835 = vdwg.mxu0
    %v836 = vand.u32 %v99, 4294901760
    %v837 = vsub.f32 %v99, %v836
    %v838 = vand.u32 %v837, 4294901760
    %v839 = vsub.f32 %v837, %v838
    %v840 = vand.u32 %v839, 4294901760
    %841 = vmatpush.msra.mxu0 %v840
    %v842 = vand.u32 %v98, 4294901760
    %v843 = vsub.f32 %v98, %v842
    %v844 = vand.u32 %v843, 4294901760
    %v845 = vsub.f32 %v843, %v844
    %v846 = vand.u32 %v845, 4294901760
    %847 = vmatpush.msra.mxu0 %v846
    %v848 = vand.u32 %v97, 4294901760
    %v849 = vsub.f32 %v97, %v848
    %v850 = vand.u32 %v849, 4294901760
    %v851 = vsub.f32 %v849, %v850
    %v852 = vand.u32 %v851, 4294901760
    %853 = vmatpush.msra.mxu0 %v852
    %v854 = vand.u32 %v96, 4294901760
    %v855 = vsub.f32 %v96, %v854
    %v856 = vand.u32 %v855, 4294901760
    %v857 = vsub.f32 %v855, %v856
    %v858 = vand.u32 %v857, 4294901760
    %859 = vmatpush.msra.mxu0 %v858
    %v860 = vand.u32 %v95, 4294901760
    %v861 = vsub.f32 %v95, %v860
    %v862 = vand.u32 %v861, 4294901760
    %v863 = vsub.f32 %v861, %v862
    %v864 = vand.u32 %v863, 4294901760
    %865 = vmatpush.msra.mxu0 %v864
    %v866 = vand.u32 %v94, 4294901760
    %v867 = vsub.f32 %v94, %v866
    %v868 = vand.u32 %v867, 4294901760
    %v869 = vsub.f32 %v867, %v868
    %v870 = vand.u32 %v869, 4294901760
    %871 = vmatpush.msra.mxu0 %v870
    %v872 = vand.u32 %v93, 4294901760
    %v873 = vsub.f32 %v93, %v872
    %v874 = vand.u32 %v873, 4294901760
    %v875 = vsub.f32 %v873, %v874
    %v876 = vand.u32 %v875, 4294901760
    %877 = vmatpush.msra.mxu0 %v876
    %v878 = vand.u32 %v92, 4294901760
    %v879 = vsub.f32 %v92, %v878
    %v880 = vand.u32 %v879, 4294901760
    %v881 = vsub.f32 %v879, %v880
    %v882 = vand.u32 %v881, 4294901760
    %883 = vmatpush.msra.mxu0 %v882
    %v884 = vand.u32 %v91, 4294901760
    %v885 = vsub.f32 %v91, %v884
    %v886 = vand.u32 %v885, 4294901760
    %v887 = vsub.f32 %v885, %v886
    %v888 = vand.u32 %v887, 4294901760
    %889 = vmatpush.msra.mxu0 %v888
    %v890 = vand.u32 %v90, 4294901760
    %v891 = vsub.f32 %v90, %v890
    %v892 = vand.u32 %v891, 4294901760
    %v893 = vsub.f32 %v891, %v892
    %v894 = vand.u32 %v893, 4294901760
    %895 = vmatpush.msra.mxu0 %v894
    %v896 = vand.u32 %v89, 4294901760
    %v897 = vsub.f32 %v89, %v896
    %v898 = vand.u32 %v897, 4294901760
    %v899 = vsub.f32 %v897, %v898
    %v900 = vand.u32 %v899, 4294901760
    %901 = vmatpush.msra.mxu0 %v900
    %v902 = vand.u32 %v88, 4294901760
    %v903 = vsub.f32 %v88, %v902
    %v904 = vand.u32 %v903, 4294901760
    %v905 = vsub.f32 %v903, %v904
    %v906 = vand.u32 %v905, 4294901760
    %907 = vmatpush.msra.mxu0 %v906
    %v908 = vand.u32 %v87, 4294901760
    %v909 = vsub.f32 %v87, %v908
    %v910 = vand.u32 %v909, 4294901760
    %v911 = vsub.f32 %v909, %v910
    %v912 = vand.u32 %v911, 4294901760
    %913 = vmatpush.msra.mxu0 %v912
    %v914 = vand.u32 %v86, 4294901760
    %v915 = vsub.f32 %v86, %v914
    %v916 = vand.u32 %v915, 4294901760
    %v917 = vsub.f32 %v915, %v916
    %v918 = vand.u32 %v917, 4294901760
    %919 = vmatpush.msra.mxu0 %v918
    %v920 = vand.u32 %v85, 4294901760
    %v921 = vsub.f32 %v85, %v920
    %v922 = vand.u32 %v921, 4294901760
    %v923 = vsub.f32 %v921, %v922
    %v924 = vand.u32 %v923, 4294901760
    %925 = vmatpush.msra.mxu0 %v924
    %v926 = vand.u32 %v84, 4294901760
    %v927 = vsub.f32 %v84, %v926
    %v928 = vand.u32 %v927, 4294901760
    %v929 = vsub.f32 %v927, %v928
    %v930 = vand.u32 %v929, 4294901760
    %931 = vmatpush.msra.mxu0 %v930
    %v932 = vand.u32 %v713, 4294901760
    %933 = vmatmul.f32.gmra.mxu0 %v932
    %v934 = vpop.f32.mrf.mxu0
    %v935 = vadd.f32 %v762, %v934
    %v936 = vand.u32 %v714, 4294901760
    %937 = vmatmul.f32.gmra.mxu0 %v936
    %v938 = vpop.f32.mrf.mxu0
    %v939 = vadd.f32 %v770, %v938
    %v940 = vand.u32 %v715, 4294901760
    %941 = vmatmul.f32.gmra.mxu0 %v940
    %v942 = vpop.f32.mrf.mxu0
    %v943 = vadd.f32 %v778, %v942
    %v944 = vand.u32 %v716, 4294901760
    %945 = vmatmul.f32.gmra.mxu0 %v944
    %v946 = vpop.f32.mrf.mxu0
    %v947 = vadd.f32 %v786, %v946
    %v948 = vand.u32 %v717, 4294901760
    %949 = vmatmul.f32.gmra.mxu0 %v948
    %v950 = vpop.f32.mrf.mxu0
    %v951 = vadd.f32 %v794, %v950
    %v952 = vand.u32 %v718, 4294901760
    %953 = vmatmul.f32.gmra.mxu0 %v952
    %v954 = vpop.f32.mrf.mxu0
    %v955 = vadd.f32 %v802, %v954
    %v956 = vand.u32 %v719, 4294901760
    %957 = vmatmul.f32.gmra.mxu0 %v956
    %v958 = vpop.f32.mrf.mxu0
    %v959 = vadd.f32 %v810, %v958
    %v960 = vand.u32 %v720, 4294901760
    %961 = vmatmul.f32.gmra.mxu0 %v960
    %v962 = vpop.f32.mrf.mxu0
    %v963 = vadd.f32 %v818, %v962
    %v964 = vand.u32 %v721, 4294901760
    %965 = vmatmul.f32.gmra.mxu0 %v964
    %v966 = vpop.f32.mrf.mxu0
    %v967 = vadd.f32 %v826, %v966
    %v968 = vand.u32 %v722, 4294901760
    %969 = vmatmul.f32.gmra.mxu0 %v968
    %v970 = vpop.f32.mrf.mxu0
    %v971 = vadd.f32 %v834, %v970
    %972 = vdwg.mxu0
    %v973 = vand.u32 %v99, 4294901760
    %v974 = vsub.f32 %v99, %v973
    %975 = vmatpush.msra.mxu0 %v974
    %v976 = vand.u32 %v98, 4294901760
    %v977 = vsub.f32 %v98, %v976
    %978 = vmatpush.msra.mxu0 %v977
    %v979 = vand.u32 %v97, 4294901760
    %v980 = vsub.f32 %v97, %v979
    %981 = vmatpush.msra.mxu0 %v980
    %v982 = vand.u32 %v96, 4294901760
    %v983 = vsub.f32 %v96, %v982
    %984 = vmatpush.msra.mxu0 %v983
    %v985 = vand.u32 %v95, 4294901760
    %v986 = vsub.f32 %v95, %v985
    %987 = vmatpush.msra.mxu0 %v986
    %v988 = vand.u32 %v94, 4294901760
    %v989 = vsub.f32 %v94, %v988
    %990 = vmatpush.msra.mxu0 %v989
    %v991 = vand.u32 %v93, 4294901760
    %v992 = vsub.f32 %v93, %v991
    %993 = vmatpush.msra.mxu0 %v992
    %v994 = vand.u32 %v92, 4294901760
    %v995 = vsub.f32 %v92, %v994
    %996 = vmatpush.msra.mxu0 %v995
    %v997 = vand.u32 %v91, 4294901760
    %v998 = vsub.f32 %v91, %v997
    %999 = vmatpush.msra.mxu0 %v998
    %v1000 = vand.u32 %v90, 4294901760
    %v1001 = vsub.f32 %v90, %v1000
    %1002 = vmatpush.msra.mxu0 %v1001
    %v1003 = vand.u32 %v89, 4294901760
    %v1004 = vsub.f32 %v89, %v1003
    %1005 = vmatpush.msra.mxu0 %v1004
    %v1006 = vand.u32 %v88, 4294901760
    %v1007 = vsub.f32 %v88, %v1006
    %1008 = vmatpush.msra.mxu0 %v1007
    %v1009 = vand.u32 %v87, 4294901760
    %v1010 = vsub.f32 %v87, %v1009
    %1011 = vmatpush.msra.mxu0 %v1010
    %v1012 = vand.u32 %v86, 4294901760
    %v1013 = vsub.f32 %v86, %v1012
    %1014 = vmatpush.msra.mxu0 %v1013
    %v1015 = vand.u32 %v85, 4294901760
    %v1016 = vsub.f32 %v85, %v1015
    %1017 = vmatpush.msra.mxu0 %v1016
    %v1018 = vand.u32 %v84, 4294901760
    %v1019 = vsub.f32 %v84, %v1018
    %1020 = vmatpush.msra.mxu0 %v1019
    %v1021 = vand.u32 %v713, 4294901760
    %v1022 = vsub.f32 %v713, %v1021
    %1023 = vmatmul.f32.gmra.mxu0 %v1022
    %v1024 = vpop.f32.mrf.mxu0
    %v1025 = vadd.f32 %v935, %v1024
    %v1026 = vand.u32 %v714, 4294901760
    %v1027 = vsub.f32 %v714, %v1026
    %1028 = vmatmul.f32.gmra.mxu0 %v1027
    %v1029 = vpop.f32.mrf.mxu0
    %v1030 = vadd.f32 %v939, %v1029
    %v1031 = vand.u32 %v715, 4294901760
    %v1032 = vsub.f32 %v715, %v1031
    %1033 = vmatmul.f32.gmra.mxu0 %v1032
    %v1034 = vpop.f32.mrf.mxu0
    %v1035 = vadd.f32 %v943, %v1034
    %v1036 = vand.u32 %v716, 4294901760
    %v1037 = vsub.f32 %v716, %v1036
    %1038 = vmatmul.f32.gmra.mxu0 %v1037
    %v1039 = vpop.f32.mrf.mxu0
    %v1040 = vadd.f32 %v947, %v1039
    %v1041 = vand.u32 %v717, 4294901760
    %v1042 = vsub.f32 %v717, %v1041
    %1043 = vmatmul.f32.gmra.mxu0 %v1042
    %v1044 = vpop.f32.mrf.mxu0
    %v1045 = vadd.f32 %v951, %v1044
    %v1046 = vand.u32 %v718, 4294901760
    %v1047 = vsub.f32 %v718, %v1046
    %1048 = vmatmul.f32.gmra.mxu0 %v1047
    %v1049 = vpop.f32.mrf.mxu0
    %v1050 = vadd.f32 %v955, %v1049
    %v1051 = vand.u32 %v719, 4294901760
    %v1052 = vsub.f32 %v719, %v1051
    %1053 = vmatmul.f32.gmra.mxu0 %v1052
    %v1054 = vpop.f32.mrf.mxu0
    %v1055 = vadd.f32 %v959, %v1054
    %v1056 = vand.u32 %v720, 4294901760
    %v1057 = vsub.f32 %v720, %v1056
    %1058 = vmatmul.f32.gmra.mxu0 %v1057
    %v1059 = vpop.f32.mrf.mxu0
    %v1060 = vadd.f32 %v963, %v1059
    %v1061 = vand.u32 %v721, 4294901760
    %v1062 = vsub.f32 %v721, %v1061
    %1063 = vmatmul.f32.gmra.mxu0 %v1062
    %v1064 = vpop.f32.mrf.mxu0
    %v1065 = vadd.f32 %v967, %v1064
    %v1066 = vand.u32 %v722, 4294901760
    %v1067 = vsub.f32 %v722, %v1066
    %1068 = vmatmul.f32.gmra.mxu0 %v1067
    %v1069 = vpop.f32.mrf.mxu0
    %v1070 = vadd.f32 %v971, %v1069
    %1071 = vdwg.mxu0
    %v1072 = vand.u32 %v99, 4294901760
    %1073 = vmatpush.msra.mxu0 %v1072
    %v1074 = vand.u32 %v98, 4294901760
    %1075 = vmatpush.msra.mxu0 %v1074
    %v1076 = vand.u32 %v97, 4294901760
    %1077 = vmatpush.msra.mxu0 %v1076
    %v1078 = vand.u32 %v96, 4294901760
    %1079 = vmatpush.msra.mxu0 %v1078
    %v1080 = vand.u32 %v95, 4294901760
    %1081 = vmatpush.msra.mxu0 %v1080
    %v1082 = vand.u32 %v94, 4294901760
    %1083 = vmatpush.msra.mxu0 %v1082
    %v1084 = vand.u32 %v93, 4294901760
    %1085 = vmatpush.msra.mxu0 %v1084
    %v1086 = vand.u32 %v92, 4294901760
    %1087 = vmatpush.msra.mxu0 %v1086
    %v1088 = vand.u32 %v91, 4294901760
    %1089 = vmatpush.msra.mxu0 %v1088
    %v1090 = vand.u32 %v90, 4294901760
    %1091 = vmatpush.msra.mxu0 %v1090
    %v1092 = vand.u32 %v89, 4294901760
    %1093 = vmatpush.msra.mxu0 %v1092
    %v1094 = vand.u32 %v88, 4294901760
    %1095 = vmatpush.msra.mxu0 %v1094
    %v1096 = vand.u32 %v87, 4294901760
    %1097 = vmatpush.msra.mxu0 %v1096
    %v1098 = vand.u32 %v86, 4294901760
    %1099 = vmatpush.msra.mxu0 %v1098
    %v1100 = vand.u32 %v85, 4294901760
    %1101 = vmatpush.msra.mxu0 %v1100
    %v1102 = vand.u32 %v84, 4294901760
    %1103 = vmatpush.msra.mxu0 %v1102
    %v1104 = vand.u32 %v713, 4294901760
    %v1105 = vsub.f32 %v713, %v1104
    %v1106 = vand.u32 %v1105, 4294901760
    %1107 = vmatmul.f32.gmra.mxu0 %v1106
    %v1108 = vpop.f32.mrf.mxu0
    %v1109 = vadd.f32 %v1025, %v1108
    %v1110 = vand.u32 %v714, 4294901760
    %v1111 = vsub.f32 %v714, %v1110
    %v1112 = vand.u32 %v1111, 4294901760
    %1113 = vmatmul.f32.gmra.mxu0 %v1112
    %v1114 = vpop.f32.mrf.mxu0
    %v1115 = vadd.f32 %v1030, %v1114
    %v1116 = vand.u32 %v715, 4294901760
    %v1117 = vsub.f32 %v715, %v1116
    %v1118 = vand.u32 %v1117, 4294901760
    %1119 = vmatmul.f32.gmra.mxu0 %v1118
    %v1120 = vpop.f32.mrf.mxu0
    %v1121 = vadd.f32 %v1035, %v1120
    %v1122 = vand.u32 %v716, 4294901760
    %v1123 = vsub.f32 %v716, %v1122
    %v1124 = vand.u32 %v1123, 4294901760
    %1125 = vmatmul.f32.gmra.mxu0 %v1124
    %v1126 = vpop.f32.mrf.mxu0
    %v1127 = vadd.f32 %v1040, %v1126
    %v1128 = vand.u32 %v717, 4294901760
    %v1129 = vsub.f32 %v717, %v1128
    %v1130 = vand.u32 %v1129, 4294901760
    %1131 = vmatmul.f32.gmra.mxu0 %v1130
    %v1132 = vpop.f32.mrf.mxu0
    %v1133 = vadd.f32 %v1045, %v1132
    %v1134 = vand.u32 %v718, 4294901760
    %v1135 = vsub.f32 %v718, %v1134
    %v1136 = vand.u32 %v1135, 4294901760
    %1137 = vmatmul.f32.gmra.mxu0 %v1136
    %v1138 = vpop.f32.mrf.mxu0
    %v1139 = vadd.f32 %v1050, %v1138
    %v1140 = vand.u32 %v719, 4294901760
    %v1141 = vsub.f32 %v719, %v1140
    %v1142 = vand.u32 %v1141, 4294901760
    %1143 = vmatmul.f32.gmra.mxu0 %v1142
    %v1144 = vpop.f32.mrf.mxu0
    %v1145 = vadd.f32 %v1055, %v1144
    %v1146 = vand.u32 %v720, 4294901760
    %v1147 = vsub.f32 %v720, %v1146
    %v1148 = vand.u32 %v1147, 4294901760
    %1149 = vmatmul.f32.gmra.mxu0 %v1148
    %v1150 = vpop.f32.mrf.mxu0
    %v1151 = vadd.f32 %v1060, %v1150
    %v1152 = vand.u32 %v721, 4294901760
    %v1153 = vsub.f32 %v721, %v1152
    %v1154 = vand.u32 %v1153, 4294901760
    %1155 = vmatmul.f32.gmra.mxu0 %v1154
    %v1156 = vpop.f32.mrf.mxu0
    %v1157 = vadd.f32 %v1065, %v1156
    %v1158 = vand.u32 %v722, 4294901760
    %v1159 = vsub.f32 %v722, %v1158
    %v1160 = vand.u32 %v1159, 4294901760
    %1161 = vmatmul.f32.gmra.mxu0 %v1160
    %v1162 = vpop.f32.mrf.mxu0
    %v1163 = vadd.f32 %v1070, %v1162
    %1164 = vdwg.mxu0
    %v1165 = vand.u32 %v99, 4294901760
    %v1166 = vsub.f32 %v99, %v1165
    %v1167 = vand.u32 %v1166, 4294901760
    %1168 = vmatpush.msra.mxu0 %v1167
    %v1169 = vand.u32 %v98, 4294901760
    %v1170 = vsub.f32 %v98, %v1169
    %v1171 = vand.u32 %v1170, 4294901760
    %1172 = vmatpush.msra.mxu0 %v1171
    %v1173 = vand.u32 %v97, 4294901760
    %v1174 = vsub.f32 %v97, %v1173
    %v1175 = vand.u32 %v1174, 4294901760
    %1176 = vmatpush.msra.mxu0 %v1175
    %v1177 = vand.u32 %v96, 4294901760
    %v1178 = vsub.f32 %v96, %v1177
    %v1179 = vand.u32 %v1178, 4294901760
    %1180 = vmatpush.msra.mxu0 %v1179
    %v1181 = vand.u32 %v95, 4294901760
    %v1182 = vsub.f32 %v95, %v1181
    %v1183 = vand.u32 %v1182, 4294901760
    %1184 = vmatpush.msra.mxu0 %v1183
    %v1185 = vand.u32 %v94, 4294901760
    %v1186 = vsub.f32 %v94, %v1185
    %v1187 = vand.u32 %v1186, 4294901760
    %1188 = vmatpush.msra.mxu0 %v1187
    %v1189 = vand.u32 %v93, 4294901760
    %v1190 = vsub.f32 %v93, %v1189
    %v1191 = vand.u32 %v1190, 4294901760
    %1192 = vmatpush.msra.mxu0 %v1191
    %v1193 = vand.u32 %v92, 4294901760
    %v1194 = vsub.f32 %v92, %v1193
    %v1195 = vand.u32 %v1194, 4294901760
    %1196 = vmatpush.msra.mxu0 %v1195
    %v1197 = vand.u32 %v91, 4294901760
    %v1198 = vsub.f32 %v91, %v1197
    %v1199 = vand.u32 %v1198, 4294901760
    %1200 = vmatpush.msra.mxu0 %v1199
    %v1201 = vand.u32 %v90, 4294901760
    %v1202 = vsub.f32 %v90, %v1201
    %v1203 = vand.u32 %v1202, 4294901760
    %1204 = vmatpush.msra.mxu0 %v1203
    %v1205 = vand.u32 %v89, 4294901760
    %v1206 = vsub.f32 %v89, %v1205
    %v1207 = vand.u32 %v1206, 4294901760
    %1208 = vmatpush.msra.mxu0 %v1207
    %v1209 = vand.u32 %v88, 4294901760
    %v1210 = vsub.f32 %v88, %v1209
    %v1211 = vand.u32 %v1210, 4294901760
    %1212 = vmatpush.msra.mxu0 %v1211
    %v1213 = vand.u32 %v87, 4294901760
    %v1214 = vsub.f32 %v87, %v1213
    %v1215 = vand.u32 %v1214, 4294901760
    %1216 = vmatpush.msra.mxu0 %v1215
    %v1217 = vand.u32 %v86, 4294901760
    %v1218 = vsub.f32 %v86, %v1217
    %v1219 = vand.u32 %v1218, 4294901760
    %1220 = vmatpush.msra.mxu0 %v1219
    %v1221 = vand.u32 %v85, 4294901760
    %v1222 = vsub.f32 %v85, %v1221
    %v1223 = vand.u32 %v1222, 4294901760
    %1224 = vmatpush.msra.mxu0 %v1223
    %v1225 = vand.u32 %v84, 4294901760
    %v1226 = vsub.f32 %v84, %v1225
    %v1227 = vand.u32 %v1226, 4294901760
    %1228 = vmatpush.msra.mxu0 %v1227
    %v1229 = vand.u32 %v713, 4294901760
    %1230 = vmatmul.f32.gmra.mxu0 %v1229
    %v1231 = vpop.f32.mrf.mxu0
    %v1232 = vadd.f32 %v1109, %v1231
    %v1233 = vand.u32 %v714, 4294901760
    %1234 = vmatmul.f32.gmra.mxu0 %v1233
    %v1235 = vpop.f32.mrf.mxu0
    %v1236 = vadd.f32 %v1115, %v1235
    %v1237 = vand.u32 %v715, 4294901760
    %1238 = vmatmul.f32.gmra.mxu0 %v1237
    %v1239 = vpop.f32.mrf.mxu0
    %v1240 = vadd.f32 %v1121, %v1239
    %v1241 = vand.u32 %v716, 4294901760
    %1242 = vmatmul.f32.gmra.mxu0 %v1241
    %v1243 = vpop.f32.mrf.mxu0
    %v1244 = vadd.f32 %v1127, %v1243
    %v1245 = vand.u32 %v717, 4294901760
    %1246 = vmatmul.f32.gmra.mxu0 %v1245
    %v1247 = vpop.f32.mrf.mxu0
    %v1248 = vadd.f32 %v1133, %v1247
    %v1249 = vand.u32 %v718, 4294901760
    %1250 = vmatmul.f32.gmra.mxu0 %v1249
    %v1251 = vpop.f32.mrf.mxu0
    %v1252 = vadd.f32 %v1139, %v1251
    %v1253 = vand.u32 %v719, 4294901760
    %1254 = vmatmul.f32.gmra.mxu0 %v1253
    %v1255 = vpop.f32.mrf.mxu0
    %v1256 = vadd.f32 %v1145, %v1255
    %v1257 = vand.u32 %v720, 4294901760
    %1258 = vmatmul.f32.gmra.mxu0 %v1257
    %v1259 = vpop.f32.mrf.mxu0
    %v1260 = vadd.f32 %v1151, %v1259
    %v1261 = vand.u32 %v721, 4294901760
    %1262 = vmatmul.f32.gmra.mxu0 %v1261
    %v1263 = vpop.f32.mrf.mxu0
    %v1264 = vadd.f32 %v1157, %v1263
    %v1265 = vand.u32 %v722, 4294901760
    %1266 = vmatmul.f32.gmra.mxu0 %v1265
    %v1267 = vpop.f32.mrf.mxu0
    %v1268 = vadd.f32 %v1163, %v1267
    %1269 = vdwg.mxu0
    %v1270 = vand.u32 %v99, 4294901760
    %1271 = vmatpush.msra.mxu0 %v1270
    %v1272 = vand.u32 %v98, 4294901760
    %1273 = vmatpush.msra.mxu0 %v1272
    %v1274 = vand.u32 %v97, 4294901760
    %1275 = vmatpush.msra.mxu0 %v1274
    %v1276 = vand.u32 %v96, 4294901760
    %1277 = vmatpush.msra.mxu0 %v1276
    %v1278 = vand.u32 %v95, 4294901760
    %1279 = vmatpush.msra.mxu0 %v1278
    %v1280 = vand.u32 %v94, 4294901760
    %1281 = vmatpush.msra.mxu0 %v1280
    %v1282 = vand.u32 %v93, 4294901760
    %1283 = vmatpush.msra.mxu0 %v1282
    %v1284 = vand.u32 %v92, 4294901760
    %1285 = vmatpush.msra.mxu0 %v1284
    %v1286 = vand.u32 %v91, 4294901760
    %1287 = vmatpush.msra.mxu0 %v1286
    %v1288 = vand.u32 %v90, 4294901760
    %1289 = vmatpush.msra.mxu0 %v1288
    %v1290 = vand.u32 %v89, 4294901760
    %1291 = vmatpush.msra.mxu0 %v1290
    %v1292 = vand.u32 %v88, 4294901760
    %1293 = vmatpush.msra.mxu0 %v1292
    %v1294 = vand.u32 %v87, 4294901760
    %1295 = vmatpush.msra.mxu0 %v1294
    %v1296 = vand.u32 %v86, 4294901760
    %1297 = vmatpush.msra.mxu0 %v1296
    %v1298 = vand.u32 %v85, 4294901760
    %1299 = vmatpush.msra.mxu0 %v1298
    %v1300 = vand.u32 %v84, 4294901760
    %1301 = vmatpush.msra.mxu0 %v1300
    %v1302 = vand.u32 %v713, 4294901760
    %1303 = vmatmul.f32.gmra.mxu0 %v1302
    %v1304 = vpop.f32.mrf.mxu0
    %v1305 = vadd.f32 %v1232, %v1304
    %v1306 = vand.u32 %v714, 4294901760
    %1307 = vmatmul.f32.gmra.mxu0 %v1306
    %v1308 = vpop.f32.mrf.mxu0
    %v1309 = vadd.f32 %v1236, %v1308
    %v1310 = vand.u32 %v715, 4294901760
    %1311 = vmatmul.f32.gmra.mxu0 %v1310
    %v1312 = vpop.f32.mrf.mxu0
    %v1313 = vadd.f32 %v1240, %v1312
    %v1314 = vand.u32 %v716, 4294901760
    %1315 = vmatmul.f32.gmra.mxu0 %v1314
    %v1316 = vpop.f32.mrf.mxu0
    %v1317 = vadd.f32 %v1244, %v1316
    %v1318 = vand.u32 %v717, 4294901760
    %1319 = vmatmul.f32.gmra.mxu0 %v1318
    %v1320 = vpop.f32.mrf.mxu0
    %v1321 = vadd.f32 %v1248, %v1320
    %v1322 = vand.u32 %v718, 4294901760
    %1323 = vmatmul.f32.gmra.mxu0 %v1322
    %v1324 = vpop.f32.mrf.mxu0
    %v1325 = vadd.f32 %v1252, %v1324
    %v1326 = vand.u32 %v719, 4294901760
    %1327 = vmatmul.f32.gmra.mxu0 %v1326
    %v1328 = vpop.f32.mrf.mxu0
    %v1329 = vadd.f32 %v1256, %v1328
    %v1330 = vand.u32 %v720, 4294901760
    %1331 = vmatmul.f32.gmra.mxu0 %v1330
    %v1332 = vpop.f32.mrf.mxu0
    %v1333 = vadd.f32 %v1260, %v1332
    %v1334 = vand.u32 %v721, 4294901760
    %1335 = vmatmul.f32.gmra.mxu0 %v1334
    %v1336 = vpop.f32.mrf.mxu0
    %v1337 = vadd.f32 %v1264, %v1336
    %v1338 = vand.u32 %v722, 4294901760
    %1339 = vmatmul.f32.gmra.mxu0 %v1338
    %v1340 = vpop.f32.mrf.mxu0
    %v1341 = vadd.f32 %v1268, %v1340
    %1342 = vdwg.mxu0
    %v1344 = vsel %vm267, %v82, 0
    %v1347 = vsel %vm267, %v83, 0
    %1349 = vmatpush.msra.mxu0 0.0
    %1350 = vmatpush.msra.mxu0 0.0
    %1351 = vmatpush.msra.mxu0 0.0
    %1352 = vmatpush.msra.mxu0 0.0
    %1353 = vmatpush.msra.mxu0 0.0
    %1354 = vmatpush.msra.mxu0 0.0
    %1355 = vmatpush.msra.mxu0 0.0
    %1356 = vmatpush.msra.mxu0 0.0
    %1357 = vmatpush.msra.mxu0 0.0
    %1358 = vmatpush.msra.mxu0 0.0
    %1359 = vmatpush.msra.mxu0 0.0
    %1360 = vmatpush.msra.mxu0 0.0
    %1361 = vmatpush.msra.mxu0 0.0
    %1362 = vmatpush.msra.mxu0 0.0
    %v1363 = vand.u32 %v1309, 4294901760
    %1364 = vmatpush.msra.mxu0 %v1363
    %v1365 = vand.u32 %v1305, 4294901760
    %1366 = vmatpush.msra.mxu0 %v1365
    %v1367 = vand.u32 %v1344, 4294901760
    %v1368 = vsub.f32 %v1344, %v1367
    %v1369 = vand.u32 %v1368, 4294901760
    %v1370 = vsub.f32 %v1368, %v1369
    %v1371 = vand.u32 %v1370, 4294901760
    %1372 = vmatmul.f32.gmra.mxu0 %v1371
    %v1373 = vpop.f32.mrf.mxu0
    %v1374 = vadd.f32 0.0, %v1373
    %v1375 = vand.u32 %v1347, 4294901760
    %v1376 = vsub.f32 %v1347, %v1375
    %v1377 = vand.u32 %v1376, 4294901760
    %v1378 = vsub.f32 %v1376, %v1377
    %v1379 = vand.u32 %v1378, 4294901760
    %1380 = vmatmul.f32.gmra.mxu0 %v1379
    %v1381 = vpop.f32.mrf.mxu0
    %v1382 = vadd.f32 0.0, %v1381
    %1383 = vdwg.mxu0
    %1384 = vmatpush.msra.mxu0 0.0
    %1385 = vmatpush.msra.mxu0 0.0
    %1386 = vmatpush.msra.mxu0 0.0
    %1387 = vmatpush.msra.mxu0 0.0
    %1388 = vmatpush.msra.mxu0 0.0
    %1389 = vmatpush.msra.mxu0 0.0
    %1390 = vmatpush.msra.mxu0 0.0
    %1391 = vmatpush.msra.mxu0 0.0
    %1392 = vmatpush.msra.mxu0 0.0
    %1393 = vmatpush.msra.mxu0 0.0
    %1394 = vmatpush.msra.mxu0 0.0
    %1395 = vmatpush.msra.mxu0 0.0
    %1396 = vmatpush.msra.mxu0 0.0
    %1397 = vmatpush.msra.mxu0 0.0
    %v1398 = vand.u32 %v1309, 4294901760
    %v1399 = vsub.f32 %v1309, %v1398
    %v1400 = vand.u32 %v1399, 4294901760
    %v1401 = vsub.f32 %v1399, %v1400
    %v1402 = vand.u32 %v1401, 4294901760
    %1403 = vmatpush.msra.mxu0 %v1402
    %v1404 = vand.u32 %v1305, 4294901760
    %v1405 = vsub.f32 %v1305, %v1404
    %v1406 = vand.u32 %v1405, 4294901760
    %v1407 = vsub.f32 %v1405, %v1406
    %v1408 = vand.u32 %v1407, 4294901760
    %1409 = vmatpush.msra.mxu0 %v1408
    %v1410 = vand.u32 %v1344, 4294901760
    %1411 = vmatmul.f32.gmra.mxu0 %v1410
    %v1412 = vpop.f32.mrf.mxu0
    %v1413 = vadd.f32 %v1374, %v1412
    %v1414 = vand.u32 %v1347, 4294901760
    %1415 = vmatmul.f32.gmra.mxu0 %v1414
    %v1416 = vpop.f32.mrf.mxu0
    %v1417 = vadd.f32 %v1382, %v1416
    %1418 = vdwg.mxu0
    %1419 = vmatpush.msra.mxu0 0.0
    %1420 = vmatpush.msra.mxu0 0.0
    %1421 = vmatpush.msra.mxu0 0.0
    %1422 = vmatpush.msra.mxu0 0.0
    %1423 = vmatpush.msra.mxu0 0.0
    %1424 = vmatpush.msra.mxu0 0.0
    %1425 = vmatpush.msra.mxu0 0.0
    %1426 = vmatpush.msra.mxu0 0.0
    %1427 = vmatpush.msra.mxu0 0.0
    %1428 = vmatpush.msra.mxu0 0.0
    %1429 = vmatpush.msra.mxu0 0.0
    %1430 = vmatpush.msra.mxu0 0.0
    %1431 = vmatpush.msra.mxu0 0.0
    %1432 = vmatpush.msra.mxu0 0.0
    %v1433 = vand.u32 %v1309, 4294901760
    %v1434 = vsub.f32 %v1309, %v1433
    %1435 = vmatpush.msra.mxu0 %v1434
    %v1436 = vand.u32 %v1305, 4294901760
    %v1437 = vsub.f32 %v1305, %v1436
    %1438 = vmatpush.msra.mxu0 %v1437
    %v1439 = vand.u32 %v1344, 4294901760
    %v1440 = vsub.f32 %v1344, %v1439
    %1441 = vmatmul.f32.gmra.mxu0 %v1440
    %v1442 = vpop.f32.mrf.mxu0
    %v1443 = vadd.f32 %v1413, %v1442
    %v1444 = vand.u32 %v1347, 4294901760
    %v1445 = vsub.f32 %v1347, %v1444
    %1446 = vmatmul.f32.gmra.mxu0 %v1445
    %v1447 = vpop.f32.mrf.mxu0
    %v1448 = vadd.f32 %v1417, %v1447
    %1449 = vdwg.mxu0
    %1450 = vmatpush.msra.mxu0 0.0
    %1451 = vmatpush.msra.mxu0 0.0
    %1452 = vmatpush.msra.mxu0 0.0
    %1453 = vmatpush.msra.mxu0 0.0
    %1454 = vmatpush.msra.mxu0 0.0
    %1455 = vmatpush.msra.mxu0 0.0
    %1456 = vmatpush.msra.mxu0 0.0
    %1457 = vmatpush.msra.mxu0 0.0
    %1458 = vmatpush.msra.mxu0 0.0
    %1459 = vmatpush.msra.mxu0 0.0
    %1460 = vmatpush.msra.mxu0 0.0
    %1461 = vmatpush.msra.mxu0 0.0
    %1462 = vmatpush.msra.mxu0 0.0
    %1463 = vmatpush.msra.mxu0 0.0
    %v1464 = vand.u32 %v1309, 4294901760
    %1465 = vmatpush.msra.mxu0 %v1464
    %v1466 = vand.u32 %v1305, 4294901760
    %1467 = vmatpush.msra.mxu0 %v1466
    %v1468 = vand.u32 %v1344, 4294901760
    %v1469 = vsub.f32 %v1344, %v1468
    %v1470 = vand.u32 %v1469, 4294901760
    %1471 = vmatmul.f32.gmra.mxu0 %v1470
    %v1472 = vpop.f32.mrf.mxu0
    %v1473 = vadd.f32 %v1443, %v1472
    %v1474 = vand.u32 %v1347, 4294901760
    %v1475 = vsub.f32 %v1347, %v1474
    %v1476 = vand.u32 %v1475, 4294901760
    %1477 = vmatmul.f32.gmra.mxu0 %v1476
    %v1478 = vpop.f32.mrf.mxu0
    %v1479 = vadd.f32 %v1448, %v1478
    %1480 = vdwg.mxu0
    %1481 = vmatpush.msra.mxu0 0.0
    %1482 = vmatpush.msra.mxu0 0.0
    %1483 = vmatpush.msra.mxu0 0.0
    %1484 = vmatpush.msra.mxu0 0.0
    %1485 = vmatpush.msra.mxu0 0.0
    %1486 = vmatpush.msra.mxu0 0.0
    %1487 = vmatpush.msra.mxu0 0.0
    %1488 = vmatpush.msra.mxu0 0.0
    %1489 = vmatpush.msra.mxu0 0.0
    %1490 = vmatpush.msra.mxu0 0.0
    %1491 = vmatpush.msra.mxu0 0.0
    %1492 = vmatpush.msra.mxu0 0.0
    %1493 = vmatpush.msra.mxu0 0.0
    %1494 = vmatpush.msra.mxu0 0.0
    %v1495 = vand.u32 %v1309, 4294901760
    %v1496 = vsub.f32 %v1309, %v1495
    %v1497 = vand.u32 %v1496, 4294901760
    %1498 = vmatpush.msra.mxu0 %v1497
    %v1499 = vand.u32 %v1305, 4294901760
    %v1500 = vsub.f32 %v1305, %v1499
    %v1501 = vand.u32 %v1500, 4294901760
    %1502 = vmatpush.msra.mxu0 %v1501
    %v1503 = vand.u32 %v1344, 4294901760
    %1504 = vmatmul.f32.gmra.mxu0 %v1503
    %v1505 = vpop.f32.mrf.mxu0
    %v1506 = vadd.f32 %v1473, %v1505
    %v1507 = vand.u32 %v1347, 4294901760
    %1508 = vmatmul.f32.gmra.mxu0 %v1507
    %v1509 = vpop.f32.mrf.mxu0
    %v1510 = vadd.f32 %v1479, %v1509
    %1511 = vdwg.mxu0
    %1512 = vmatpush.msra.mxu0 0.0
    %1513 = vmatpush.msra.mxu0 0.0
    %1514 = vmatpush.msra.mxu0 0.0
    %1515 = vmatpush.msra.mxu0 0.0
    %1516 = vmatpush.msra.mxu0 0.0
    %1517 = vmatpush.msra.mxu0 0.0
    %1518 = vmatpush.msra.mxu0 0.0
    %1519 = vmatpush.msra.mxu0 0.0
    %1520 = vmatpush.msra.mxu0 0.0
    %1521 = vmatpush.msra.mxu0 0.0
    %1522 = vmatpush.msra.mxu0 0.0
    %1523 = vmatpush.msra.mxu0 0.0
    %1524 = vmatpush.msra.mxu0 0.0
    %1525 = vmatpush.msra.mxu0 0.0
    %v1526 = vand.u32 %v1309, 4294901760
    %1527 = vmatpush.msra.mxu0 %v1526
    %v1528 = vand.u32 %v1305, 4294901760
    %1529 = vmatpush.msra.mxu0 %v1528
    %v1530 = vand.u32 %v1344, 4294901760
    %1531 = vmatmul.f32.gmra.mxu0 %v1530
    %v1532 = vpop.f32.mrf.mxu0
    %v1533 = vadd.f32 %v1506, %v1532
    %v1534 = vand.u32 %v1347, 4294901760
    %1535 = vmatmul.f32.gmra.mxu0 %v1534
    %v1536 = vpop.f32.mrf.mxu0
    %v1537 = vadd.f32 %v1510, %v1536
    %1538 = vdwg.mxu0
    %1539 = vmatpush.msra.mxu0 0.0
    %1540 = vmatpush.msra.mxu0 0.0
    %1541 = vmatpush.msra.mxu0 0.0
    %1542 = vmatpush.msra.mxu0 0.0
    %1543 = vmatpush.msra.mxu0 0.0
    %1544 = vmatpush.msra.mxu0 0.0
    %1545 = vmatpush.msra.mxu0 0.0
    %1546 = vmatpush.msra.mxu0 0.0
    %1547 = vmatpush.msra.mxu0 0.0
    %1548 = vmatpush.msra.mxu0 0.0
    %1549 = vmatpush.msra.mxu0 0.0
    %1550 = vmatpush.msra.mxu0 0.0
    %1551 = vmatpush.msra.mxu0 0.0
    %1552 = vmatpush.msra.mxu0 0.0
    %v1553 = vand.u32 %v1317, 4294901760
    %1554 = vmatpush.msra.mxu0 %v1553
    %v1555 = vand.u32 %v1313, 4294901760
    %1556 = vmatpush.msra.mxu0 %v1555
    %v1557 = vand.u32 %v1344, 4294901760
    %v1558 = vsub.f32 %v1344, %v1557
    %v1559 = vand.u32 %v1558, 4294901760
    %v1560 = vsub.f32 %v1558, %v1559
    %v1561 = vand.u32 %v1560, 4294901760
    %1562 = vmatmul.f32.gmra.mxu0 %v1561
    %v1563 = vpop.f32.mrf.mxu0
    %v1564 = vadd.f32 0.0, %v1563
    %v1565 = vand.u32 %v1347, 4294901760
    %v1566 = vsub.f32 %v1347, %v1565
    %v1567 = vand.u32 %v1566, 4294901760
    %v1568 = vsub.f32 %v1566, %v1567
    %v1569 = vand.u32 %v1568, 4294901760
    %1570 = vmatmul.f32.gmra.mxu0 %v1569
    %v1571 = vpop.f32.mrf.mxu0
    %v1572 = vadd.f32 0.0, %v1571
    %1573 = vdwg.mxu0
    %1574 = vmatpush.msra.mxu0 0.0
    %1575 = vmatpush.msra.mxu0 0.0
    %1576 = vmatpush.msra.mxu0 0.0
    %1577 = vmatpush.msra.mxu0 0.0
    %1578 = vmatpush.msra.mxu0 0.0
    %1579 = vmatpush.msra.mxu0 0.0
    %1580 = vmatpush.msra.mxu0 0.0
    %1581 = vmatpush.msra.mxu0 0.0
    %1582 = vmatpush.msra.mxu0 0.0
    %1583 = vmatpush.msra.mxu0 0.0
    %1584 = vmatpush.msra.mxu0 0.0
    %1585 = vmatpush.msra.mxu0 0.0
    %1586 = vmatpush.msra.mxu0 0.0
    %1587 = vmatpush.msra.mxu0 0.0
    %v1588 = vand.u32 %v1317, 4294901760
    %v1589 = vsub.f32 %v1317, %v1588
    %v1590 = vand.u32 %v1589, 4294901760
    %v1591 = vsub.f32 %v1589, %v1590
    %v1592 = vand.u32 %v1591, 4294901760
    %1593 = vmatpush.msra.mxu0 %v1592
    %v1594 = vand.u32 %v1313, 4294901760
    %v1595 = vsub.f32 %v1313, %v1594
    %v1596 = vand.u32 %v1595, 4294901760
    %v1597 = vsub.f32 %v1595, %v1596
    %v1598 = vand.u32 %v1597, 4294901760
    %1599 = vmatpush.msra.mxu0 %v1598
    %v1600 = vand.u32 %v1344, 4294901760
    %1601 = vmatmul.f32.gmra.mxu0 %v1600
    %v1602 = vpop.f32.mrf.mxu0
    %v1603 = vadd.f32 %v1564, %v1602
    %v1604 = vand.u32 %v1347, 4294901760
    %1605 = vmatmul.f32.gmra.mxu0 %v1604
    %v1606 = vpop.f32.mrf.mxu0
    %v1607 = vadd.f32 %v1572, %v1606
    %1608 = vdwg.mxu0
    %1609 = vmatpush.msra.mxu0 0.0
    %1610 = vmatpush.msra.mxu0 0.0
    %1611 = vmatpush.msra.mxu0 0.0
    %1612 = vmatpush.msra.mxu0 0.0
    %1613 = vmatpush.msra.mxu0 0.0
    %1614 = vmatpush.msra.mxu0 0.0
    %1615 = vmatpush.msra.mxu0 0.0
    %1616 = vmatpush.msra.mxu0 0.0
    %1617 = vmatpush.msra.mxu0 0.0
    %1618 = vmatpush.msra.mxu0 0.0
    %1619 = vmatpush.msra.mxu0 0.0
    %1620 = vmatpush.msra.mxu0 0.0
    %1621 = vmatpush.msra.mxu0 0.0
    %1622 = vmatpush.msra.mxu0 0.0
    %v1623 = vand.u32 %v1317, 4294901760
    %v1624 = vsub.f32 %v1317, %v1623
    %1625 = vmatpush.msra.mxu0 %v1624
    %v1626 = vand.u32 %v1313, 4294901760
    %v1627 = vsub.f32 %v1313, %v1626
    %1628 = vmatpush.msra.mxu0 %v1627
    %v1629 = vand.u32 %v1344, 4294901760
    %v1630 = vsub.f32 %v1344, %v1629
    %1631 = vmatmul.f32.gmra.mxu0 %v1630
    %v1632 = vpop.f32.mrf.mxu0
    %v1633 = vadd.f32 %v1603, %v1632
    %v1634 = vand.u32 %v1347, 4294901760
    %v1635 = vsub.f32 %v1347, %v1634
    %1636 = vmatmul.f32.gmra.mxu0 %v1635
    %v1637 = vpop.f32.mrf.mxu0
    %v1638 = vadd.f32 %v1607, %v1637
    %1639 = vdwg.mxu0
    %1640 = vmatpush.msra.mxu0 0.0
    %1641 = vmatpush.msra.mxu0 0.0
    %1642 = vmatpush.msra.mxu0 0.0
    %1643 = vmatpush.msra.mxu0 0.0
    %1644 = vmatpush.msra.mxu0 0.0
    %1645 = vmatpush.msra.mxu0 0.0
    %1646 = vmatpush.msra.mxu0 0.0
    %1647 = vmatpush.msra.mxu0 0.0
    %1648 = vmatpush.msra.mxu0 0.0
    %1649 = vmatpush.msra.mxu0 0.0
    %1650 = vmatpush.msra.mxu0 0.0
    %1651 = vmatpush.msra.mxu0 0.0
    %1652 = vmatpush.msra.mxu0 0.0
    %1653 = vmatpush.msra.mxu0 0.0
    %v1654 = vand.u32 %v1317, 4294901760
    %1655 = vmatpush.msra.mxu0 %v1654
    %v1656 = vand.u32 %v1313, 4294901760
    %1657 = vmatpush.msra.mxu0 %v1656
    %v1658 = vand.u32 %v1344, 4294901760
    %v1659 = vsub.f32 %v1344, %v1658
    %v1660 = vand.u32 %v1659, 4294901760
    %1661 = vmatmul.f32.gmra.mxu0 %v1660
    %v1662 = vpop.f32.mrf.mxu0
    %v1663 = vadd.f32 %v1633, %v1662
    %v1664 = vand.u32 %v1347, 4294901760
    %v1665 = vsub.f32 %v1347, %v1664
    %v1666 = vand.u32 %v1665, 4294901760
    %1667 = vmatmul.f32.gmra.mxu0 %v1666
    %v1668 = vpop.f32.mrf.mxu0
    %v1669 = vadd.f32 %v1638, %v1668
    %1670 = vdwg.mxu0
    %1671 = vmatpush.msra.mxu0 0.0
    %1672 = vmatpush.msra.mxu0 0.0
    %1673 = vmatpush.msra.mxu0 0.0
    %1674 = vmatpush.msra.mxu0 0.0
    %1675 = vmatpush.msra.mxu0 0.0
    %1676 = vmatpush.msra.mxu0 0.0
    %1677 = vmatpush.msra.mxu0 0.0
    %1678 = vmatpush.msra.mxu0 0.0
    %1679 = vmatpush.msra.mxu0 0.0
    %1680 = vmatpush.msra.mxu0 0.0
    %1681 = vmatpush.msra.mxu0 0.0
    %1682 = vmatpush.msra.mxu0 0.0
    %1683 = vmatpush.msra.mxu0 0.0
    %1684 = vmatpush.msra.mxu0 0.0
    %v1685 = vand.u32 %v1317, 4294901760
    %v1686 = vsub.f32 %v1317, %v1685
    %v1687 = vand.u32 %v1686, 4294901760
    %1688 = vmatpush.msra.mxu0 %v1687
    %v1689 = vand.u32 %v1313, 4294901760
    %v1690 = vsub.f32 %v1313, %v1689
    %v1691 = vand.u32 %v1690, 4294901760
    %1692 = vmatpush.msra.mxu0 %v1691
    %v1693 = vand.u32 %v1344, 4294901760
    %1694 = vmatmul.f32.gmra.mxu0 %v1693
    %v1695 = vpop.f32.mrf.mxu0
    %v1696 = vadd.f32 %v1663, %v1695
    %v1697 = vand.u32 %v1347, 4294901760
    %1698 = vmatmul.f32.gmra.mxu0 %v1697
    %v1699 = vpop.f32.mrf.mxu0
    %v1700 = vadd.f32 %v1669, %v1699
    %1701 = vdwg.mxu0
    %1702 = vmatpush.msra.mxu0 0.0
    %1703 = vmatpush.msra.mxu0 0.0
    %1704 = vmatpush.msra.mxu0 0.0
    %1705 = vmatpush.msra.mxu0 0.0
    %1706 = vmatpush.msra.mxu0 0.0
    %1707 = vmatpush.msra.mxu0 0.0
    %1708 = vmatpush.msra.mxu0 0.0
    %1709 = vmatpush.msra.mxu0 0.0
    %1710 = vmatpush.msra.mxu0 0.0
    %1711 = vmatpush.msra.mxu0 0.0
    %1712 = vmatpush.msra.mxu0 0.0
    %1713 = vmatpush.msra.mxu0 0.0
    %1714 = vmatpush.msra.mxu0 0.0
    %1715 = vmatpush.msra.mxu0 0.0
    %v1716 = vand.u32 %v1317, 4294901760
    %1717 = vmatpush.msra.mxu0 %v1716
    %v1718 = vand.u32 %v1313, 4294901760
    %1719 = vmatpush.msra.mxu0 %v1718
    %v1720 = vand.u32 %v1344, 4294901760
    %1721 = vmatmul.f32.gmra.mxu0 %v1720
    %v1722 = vpop.f32.mrf.mxu0
    %v1723 = vadd.f32 %v1696, %v1722
    %v1724 = vand.u32 %v1347, 4294901760
    %1725 = vmatmul.f32.gmra.mxu0 %v1724
    %v1726 = vpop.f32.mrf.mxu0
    %v1727 = vadd.f32 %v1700, %v1726
    %1728 = vdwg.mxu0
    %1729 = vmatpush.msra.mxu0 0.0
    %1730 = vmatpush.msra.mxu0 0.0
    %1731 = vmatpush.msra.mxu0 0.0
    %1732 = vmatpush.msra.mxu0 0.0
    %1733 = vmatpush.msra.mxu0 0.0
    %1734 = vmatpush.msra.mxu0 0.0
    %1735 = vmatpush.msra.mxu0 0.0
    %1736 = vmatpush.msra.mxu0 0.0
    %1737 = vmatpush.msra.mxu0 0.0
    %1738 = vmatpush.msra.mxu0 0.0
    %1739 = vmatpush.msra.mxu0 0.0
    %1740 = vmatpush.msra.mxu0 0.0
    %1741 = vmatpush.msra.mxu0 0.0
    %1742 = vmatpush.msra.mxu0 0.0
    %v1743 = vand.u32 %v1325, 4294901760
    %1744 = vmatpush.msra.mxu0 %v1743
    %v1745 = vand.u32 %v1321, 4294901760
    %1746 = vmatpush.msra.mxu0 %v1745
    %v1747 = vand.u32 %v1344, 4294901760
    %v1748 = vsub.f32 %v1344, %v1747
    %v1749 = vand.u32 %v1748, 4294901760
    %v1750 = vsub.f32 %v1748, %v1749
    %v1751 = vand.u32 %v1750, 4294901760
    %1752 = vmatmul.f32.gmra.mxu0 %v1751
    %v1753 = vpop.f32.mrf.mxu0
    %v1754 = vadd.f32 0.0, %v1753
    %v1755 = vand.u32 %v1347, 4294901760
    %v1756 = vsub.f32 %v1347, %v1755
    %v1757 = vand.u32 %v1756, 4294901760
    %v1758 = vsub.f32 %v1756, %v1757
    %v1759 = vand.u32 %v1758, 4294901760
    %1760 = vmatmul.f32.gmra.mxu0 %v1759
    %v1761 = vpop.f32.mrf.mxu0
    %v1762 = vadd.f32 0.0, %v1761
    %1763 = vdwg.mxu0
    %1764 = vmatpush.msra.mxu0 0.0
    %1765 = vmatpush.msra.mxu0 0.0
    %1766 = vmatpush.msra.mxu0 0.0
    %1767 = vmatpush.msra.mxu0 0.0
    %1768 = vmatpush.msra.mxu0 0.0
    %1769 = vmatpush.msra.mxu0 0.0
    %1770 = vmatpush.msra.mxu0 0.0
    %1771 = vmatpush.msra.mxu0 0.0
    %1772 = vmatpush.msra.mxu0 0.0
    %1773 = vmatpush.msra.mxu0 0.0
    %1774 = vmatpush.msra.mxu0 0.0
    %1775 = vmatpush.msra.mxu0 0.0
    %1776 = vmatpush.msra.mxu0 0.0
    %1777 = vmatpush.msra.mxu0 0.0
    %v1778 = vand.u32 %v1325, 4294901760
    %v1779 = vsub.f32 %v1325, %v1778
    %v1780 = vand.u32 %v1779, 4294901760
    %v1781 = vsub.f32 %v1779, %v1780
    %v1782 = vand.u32 %v1781, 4294901760
    %1783 = vmatpush.msra.mxu0 %v1782
    %v1784 = vand.u32 %v1321, 4294901760
    %v1785 = vsub.f32 %v1321, %v1784
    %v1786 = vand.u32 %v1785, 4294901760
    %v1787 = vsub.f32 %v1785, %v1786
    %v1788 = vand.u32 %v1787, 4294901760
    %1789 = vmatpush.msra.mxu0 %v1788
    %v1790 = vand.u32 %v1344, 4294901760
    %1791 = vmatmul.f32.gmra.mxu0 %v1790
    %v1792 = vpop.f32.mrf.mxu0
    %v1793 = vadd.f32 %v1754, %v1792
    %v1794 = vand.u32 %v1347, 4294901760
    %1795 = vmatmul.f32.gmra.mxu0 %v1794
    %v1796 = vpop.f32.mrf.mxu0
    %v1797 = vadd.f32 %v1762, %v1796
    %1798 = vdwg.mxu0
    %1799 = vmatpush.msra.mxu0 0.0
    %1800 = vmatpush.msra.mxu0 0.0
    %1801 = vmatpush.msra.mxu0 0.0
    %1802 = vmatpush.msra.mxu0 0.0
    %1803 = vmatpush.msra.mxu0 0.0
    %1804 = vmatpush.msra.mxu0 0.0
    %1805 = vmatpush.msra.mxu0 0.0
    %1806 = vmatpush.msra.mxu0 0.0
    %1807 = vmatpush.msra.mxu0 0.0
    %1808 = vmatpush.msra.mxu0 0.0
    %1809 = vmatpush.msra.mxu0 0.0
    %1810 = vmatpush.msra.mxu0 0.0
    %1811 = vmatpush.msra.mxu0 0.0
    %1812 = vmatpush.msra.mxu0 0.0
    %v1813 = vand.u32 %v1325, 4294901760
    %v1814 = vsub.f32 %v1325, %v1813
    %1815 = vmatpush.msra.mxu0 %v1814
    %v1816 = vand.u32 %v1321, 4294901760
    %v1817 = vsub.f32 %v1321, %v1816
    %1818 = vmatpush.msra.mxu0 %v1817
    %v1819 = vand.u32 %v1344, 4294901760
    %v1820 = vsub.f32 %v1344, %v1819
    %1821 = vmatmul.f32.gmra.mxu0 %v1820
    %v1822 = vpop.f32.mrf.mxu0
    %v1823 = vadd.f32 %v1793, %v1822
    %v1824 = vand.u32 %v1347, 4294901760
    %v1825 = vsub.f32 %v1347, %v1824
    %1826 = vmatmul.f32.gmra.mxu0 %v1825
    %v1827 = vpop.f32.mrf.mxu0
    %v1828 = vadd.f32 %v1797, %v1827
    %1829 = vdwg.mxu0
    %1830 = vmatpush.msra.mxu0 0.0
    %1831 = vmatpush.msra.mxu0 0.0
    %1832 = vmatpush.msra.mxu0 0.0
    %1833 = vmatpush.msra.mxu0 0.0
    %1834 = vmatpush.msra.mxu0 0.0
    %1835 = vmatpush.msra.mxu0 0.0
    %1836 = vmatpush.msra.mxu0 0.0
    %1837 = vmatpush.msra.mxu0 0.0
    %1838 = vmatpush.msra.mxu0 0.0
    %1839 = vmatpush.msra.mxu0 0.0
    %1840 = vmatpush.msra.mxu0 0.0
    %1841 = vmatpush.msra.mxu0 0.0
    %1842 = vmatpush.msra.mxu0 0.0
    %1843 = vmatpush.msra.mxu0 0.0
    %v1844 = vand.u32 %v1325, 4294901760
    %1845 = vmatpush.msra.mxu0 %v1844
    %v1846 = vand.u32 %v1321, 4294901760
    %1847 = vmatpush.msra.mxu0 %v1846
    %v1848 = vand.u32 %v1344, 4294901760
    %v1849 = vsub.f32 %v1344, %v1848
    %v1850 = vand.u32 %v1849, 4294901760
    %1851 = vmatmul.f32.gmra.mxu0 %v1850
    %v1852 = vpop.f32.mrf.mxu0
    %v1853 = vadd.f32 %v1823, %v1852
    %v1854 = vand.u32 %v1347, 4294901760
    %v1855 = vsub.f32 %v1347, %v1854
    %v1856 = vand.u32 %v1855, 4294901760
    %1857 = vmatmul.f32.gmra.mxu0 %v1856
    %v1858 = vpop.f32.mrf.mxu0
    %v1859 = vadd.f32 %v1828, %v1858
    %1860 = vdwg.mxu0
    %1861 = vmatpush.msra.mxu0 0.0
    %1862 = vmatpush.msra.mxu0 0.0
    %1863 = vmatpush.msra.mxu0 0.0
    %1864 = vmatpush.msra.mxu0 0.0
    %1865 = vmatpush.msra.mxu0 0.0
    %1866 = vmatpush.msra.mxu0 0.0
    %1867 = vmatpush.msra.mxu0 0.0
    %1868 = vmatpush.msra.mxu0 0.0
    %1869 = vmatpush.msra.mxu0 0.0
    %1870 = vmatpush.msra.mxu0 0.0
    %1871 = vmatpush.msra.mxu0 0.0
    %1872 = vmatpush.msra.mxu0 0.0
    %1873 = vmatpush.msra.mxu0 0.0
    %1874 = vmatpush.msra.mxu0 0.0
    %v1875 = vand.u32 %v1325, 4294901760
    %v1876 = vsub.f32 %v1325, %v1875
    %v1877 = vand.u32 %v1876, 4294901760
    %1878 = vmatpush.msra.mxu0 %v1877
    %v1879 = vand.u32 %v1321, 4294901760
    %v1880 = vsub.f32 %v1321, %v1879
    %v1881 = vand.u32 %v1880, 4294901760
    %1882 = vmatpush.msra.mxu0 %v1881
    %v1883 = vand.u32 %v1344, 4294901760
    %1884 = vmatmul.f32.gmra.mxu0 %v1883
    %v1885 = vpop.f32.mrf.mxu0
    %v1886 = vadd.f32 %v1853, %v1885
    %v1887 = vand.u32 %v1347, 4294901760
    %1888 = vmatmul.f32.gmra.mxu0 %v1887
    %v1889 = vpop.f32.mrf.mxu0
    %v1890 = vadd.f32 %v1859, %v1889
    %1891 = vdwg.mxu0
    %1892 = vmatpush.msra.mxu0 0.0
    %1893 = vmatpush.msra.mxu0 0.0
    %1894 = vmatpush.msra.mxu0 0.0
    %1895 = vmatpush.msra.mxu0 0.0
    %1896 = vmatpush.msra.mxu0 0.0
    %1897 = vmatpush.msra.mxu0 0.0
    %1898 = vmatpush.msra.mxu0 0.0
    %1899 = vmatpush.msra.mxu0 0.0
    %1900 = vmatpush.msra.mxu0 0.0
    %1901 = vmatpush.msra.mxu0 0.0
    %1902 = vmatpush.msra.mxu0 0.0
    %1903 = vmatpush.msra.mxu0 0.0
    %1904 = vmatpush.msra.mxu0 0.0
    %1905 = vmatpush.msra.mxu0 0.0
    %v1906 = vand.u32 %v1325, 4294901760
    %1907 = vmatpush.msra.mxu0 %v1906
    %v1908 = vand.u32 %v1321, 4294901760
    %1909 = vmatpush.msra.mxu0 %v1908
    %v1910 = vand.u32 %v1344, 4294901760
    %1911 = vmatmul.f32.gmra.mxu0 %v1910
    %v1912 = vpop.f32.mrf.mxu0
    %v1913 = vadd.f32 %v1886, %v1912
    %v1914 = vand.u32 %v1347, 4294901760
    %1915 = vmatmul.f32.gmra.mxu0 %v1914
    %v1916 = vpop.f32.mrf.mxu0
    %v1917 = vadd.f32 %v1890, %v1916
    %1918 = vdwg.mxu0
    %1919 = vmatpush.msra.mxu0 0.0
    %1920 = vmatpush.msra.mxu0 0.0
    %1921 = vmatpush.msra.mxu0 0.0
    %1922 = vmatpush.msra.mxu0 0.0
    %1923 = vmatpush.msra.mxu0 0.0
    %1924 = vmatpush.msra.mxu0 0.0
    %1925 = vmatpush.msra.mxu0 0.0
    %1926 = vmatpush.msra.mxu0 0.0
    %1927 = vmatpush.msra.mxu0 0.0
    %1928 = vmatpush.msra.mxu0 0.0
    %1929 = vmatpush.msra.mxu0 0.0
    %1930 = vmatpush.msra.mxu0 0.0
    %1931 = vmatpush.msra.mxu0 0.0
    %1932 = vmatpush.msra.mxu0 0.0
    %v1933 = vand.u32 %v1333, 4294901760
    %1934 = vmatpush.msra.mxu0 %v1933
    %v1935 = vand.u32 %v1329, 4294901760
    %1936 = vmatpush.msra.mxu0 %v1935
    %v1937 = vand.u32 %v1344, 4294901760
    %v1938 = vsub.f32 %v1344, %v1937
    %v1939 = vand.u32 %v1938, 4294901760
    %v1940 = vsub.f32 %v1938, %v1939
    %v1941 = vand.u32 %v1940, 4294901760
    %1942 = vmatmul.f32.gmra.mxu0 %v1941
    %v1943 = vpop.f32.mrf.mxu0
    %v1944 = vadd.f32 0.0, %v1943
    %v1945 = vand.u32 %v1347, 4294901760
    %v1946 = vsub.f32 %v1347, %v1945
    %v1947 = vand.u32 %v1946, 4294901760
    %v1948 = vsub.f32 %v1946, %v1947
    %v1949 = vand.u32 %v1948, 4294901760
    %1950 = vmatmul.f32.gmra.mxu0 %v1949
    %v1951 = vpop.f32.mrf.mxu0
    %v1952 = vadd.f32 0.0, %v1951
    %1953 = vdwg.mxu0
    %1954 = vmatpush.msra.mxu0 0.0
    %1955 = vmatpush.msra.mxu0 0.0
    %1956 = vmatpush.msra.mxu0 0.0
    %1957 = vmatpush.msra.mxu0 0.0
    %1958 = vmatpush.msra.mxu0 0.0
    %1959 = vmatpush.msra.mxu0 0.0
    %1960 = vmatpush.msra.mxu0 0.0
    %1961 = vmatpush.msra.mxu0 0.0
    %1962 = vmatpush.msra.mxu0 0.0
    %1963 = vmatpush.msra.mxu0 0.0
    %1964 = vmatpush.msra.mxu0 0.0
    %1965 = vmatpush.msra.mxu0 0.0
    %1966 = vmatpush.msra.mxu0 0.0
    %1967 = vmatpush.msra.mxu0 0.0
    %v1968 = vand.u32 %v1333, 4294901760
    %v1969 = vsub.f32 %v1333, %v1968
    %v1970 = vand.u32 %v1969, 4294901760
    %v1971 = vsub.f32 %v1969, %v1970
    %v1972 = vand.u32 %v1971, 4294901760
    %1973 = vmatpush.msra.mxu0 %v1972
    %v1974 = vand.u32 %v1329, 4294901760
    %v1975 = vsub.f32 %v1329, %v1974
    %v1976 = vand.u32 %v1975, 4294901760
    %v1977 = vsub.f32 %v1975, %v1976
    %v1978 = vand.u32 %v1977, 4294901760
    %1979 = vmatpush.msra.mxu0 %v1978
    %v1980 = vand.u32 %v1344, 4294901760
    %1981 = vmatmul.f32.gmra.mxu0 %v1980
    %v1982 = vpop.f32.mrf.mxu0
    %v1983 = vadd.f32 %v1944, %v1982
    %v1984 = vand.u32 %v1347, 4294901760
    %1985 = vmatmul.f32.gmra.mxu0 %v1984
    %v1986 = vpop.f32.mrf.mxu0
    %v1987 = vadd.f32 %v1952, %v1986
    %1988 = vdwg.mxu0
    %1989 = vmatpush.msra.mxu0 0.0
    %1990 = vmatpush.msra.mxu0 0.0
    %1991 = vmatpush.msra.mxu0 0.0
    %1992 = vmatpush.msra.mxu0 0.0
    %1993 = vmatpush.msra.mxu0 0.0
    %1994 = vmatpush.msra.mxu0 0.0
    %1995 = vmatpush.msra.mxu0 0.0
    %1996 = vmatpush.msra.mxu0 0.0
    %1997 = vmatpush.msra.mxu0 0.0
    %1998 = vmatpush.msra.mxu0 0.0
    %1999 = vmatpush.msra.mxu0 0.0
    %2000 = vmatpush.msra.mxu0 0.0
    %2001 = vmatpush.msra.mxu0 0.0
    %2002 = vmatpush.msra.mxu0 0.0
    %v2003 = vand.u32 %v1333, 4294901760
    %v2004 = vsub.f32 %v1333, %v2003
    %2005 = vmatpush.msra.mxu0 %v2004
    %v2006 = vand.u32 %v1329, 4294901760
    %v2007 = vsub.f32 %v1329, %v2006
    %2008 = vmatpush.msra.mxu0 %v2007
    %v2009 = vand.u32 %v1344, 4294901760
    %v2010 = vsub.f32 %v1344, %v2009
    %2011 = vmatmul.f32.gmra.mxu0 %v2010
    %v2012 = vpop.f32.mrf.mxu0
    %v2013 = vadd.f32 %v1983, %v2012
    %v2014 = vand.u32 %v1347, 4294901760
    %v2015 = vsub.f32 %v1347, %v2014
    %2016 = vmatmul.f32.gmra.mxu0 %v2015
    %v2017 = vpop.f32.mrf.mxu0
    %v2018 = vadd.f32 %v1987, %v2017
    %2019 = vdwg.mxu0
    %2020 = vmatpush.msra.mxu0 0.0
    %2021 = vmatpush.msra.mxu0 0.0
    %2022 = vmatpush.msra.mxu0 0.0
    %2023 = vmatpush.msra.mxu0 0.0
    %2024 = vmatpush.msra.mxu0 0.0
    %2025 = vmatpush.msra.mxu0 0.0
    %2026 = vmatpush.msra.mxu0 0.0
    %2027 = vmatpush.msra.mxu0 0.0
    %2028 = vmatpush.msra.mxu0 0.0
    %2029 = vmatpush.msra.mxu0 0.0
    %2030 = vmatpush.msra.mxu0 0.0
    %2031 = vmatpush.msra.mxu0 0.0
    %2032 = vmatpush.msra.mxu0 0.0
    %2033 = vmatpush.msra.mxu0 0.0
    %v2034 = vand.u32 %v1333, 4294901760
    %2035 = vmatpush.msra.mxu0 %v2034
    %v2036 = vand.u32 %v1329, 4294901760
    %2037 = vmatpush.msra.mxu0 %v2036
    %v2038 = vand.u32 %v1344, 4294901760
    %v2039 = vsub.f32 %v1344, %v2038
    %v2040 = vand.u32 %v2039, 4294901760
    %2041 = vmatmul.f32.gmra.mxu0 %v2040
    %v2042 = vpop.f32.mrf.mxu0
    %v2043 = vadd.f32 %v2013, %v2042
    %v2044 = vand.u32 %v1347, 4294901760
    %v2045 = vsub.f32 %v1347, %v2044
    %v2046 = vand.u32 %v2045, 4294901760
    %2047 = vmatmul.f32.gmra.mxu0 %v2046
    %v2048 = vpop.f32.mrf.mxu0
    %v2049 = vadd.f32 %v2018, %v2048
    %2050 = vdwg.mxu0
    %2051 = vmatpush.msra.mxu0 0.0
    %2052 = vmatpush.msra.mxu0 0.0
    %2053 = vmatpush.msra.mxu0 0.0
    %2054 = vmatpush.msra.mxu0 0.0
    %2055 = vmatpush.msra.mxu0 0.0
    %2056 = vmatpush.msra.mxu0 0.0
    %2057 = vmatpush.msra.mxu0 0.0
    %2058 = vmatpush.msra.mxu0 0.0
    %2059 = vmatpush.msra.mxu0 0.0
    %2060 = vmatpush.msra.mxu0 0.0
    %2061 = vmatpush.msra.mxu0 0.0
    %2062 = vmatpush.msra.mxu0 0.0
    %2063 = vmatpush.msra.mxu0 0.0
    %2064 = vmatpush.msra.mxu0 0.0
    %v2065 = vand.u32 %v1333, 4294901760
    %v2066 = vsub.f32 %v1333, %v2065
    %v2067 = vand.u32 %v2066, 4294901760
    %2068 = vmatpush.msra.mxu0 %v2067
    %v2069 = vand.u32 %v1329, 4294901760
    %v2070 = vsub.f32 %v1329, %v2069
    %v2071 = vand.u32 %v2070, 4294901760
    %2072 = vmatpush.msra.mxu0 %v2071
    %v2073 = vand.u32 %v1344, 4294901760
    %2074 = vmatmul.f32.gmra.mxu0 %v2073
    %v2075 = vpop.f32.mrf.mxu0
    %v2076 = vadd.f32 %v2043, %v2075
    %v2077 = vand.u32 %v1347, 4294901760
    %2078 = vmatmul.f32.gmra.mxu0 %v2077
    %v2079 = vpop.f32.mrf.mxu0
    %v2080 = vadd.f32 %v2049, %v2079
    %2081 = vdwg.mxu0
    %2082 = vmatpush.msra.mxu0 0.0
    %2083 = vmatpush.msra.mxu0 0.0
    %2084 = vmatpush.msra.mxu0 0.0
    %2085 = vmatpush.msra.mxu0 0.0
    %2086 = vmatpush.msra.mxu0 0.0
    %2087 = vmatpush.msra.mxu0 0.0
    %2088 = vmatpush.msra.mxu0 0.0
    %2089 = vmatpush.msra.mxu0 0.0
    %2090 = vmatpush.msra.mxu0 0.0
    %2091 = vmatpush.msra.mxu0 0.0
    %2092 = vmatpush.msra.mxu0 0.0
    %2093 = vmatpush.msra.mxu0 0.0
    %2094 = vmatpush.msra.mxu0 0.0
    %2095 = vmatpush.msra.mxu0 0.0
    %v2096 = vand.u32 %v1333, 4294901760
    %2097 = vmatpush.msra.mxu0 %v2096
    %v2098 = vand.u32 %v1329, 4294901760
    %2099 = vmatpush.msra.mxu0 %v2098
    %v2100 = vand.u32 %v1344, 4294901760
    %2101 = vmatmul.f32.gmra.mxu0 %v2100
    %v2102 = vpop.f32.mrf.mxu0
    %v2103 = vadd.f32 %v2076, %v2102
    %v2104 = vand.u32 %v1347, 4294901760
    %2105 = vmatmul.f32.gmra.mxu0 %v2104
    %v2106 = vpop.f32.mrf.mxu0
    %v2107 = vadd.f32 %v2080, %v2106
    %2108 = vdwg.mxu0
    %2109 = vmatpush.msra.mxu0 0.0
    %2110 = vmatpush.msra.mxu0 0.0
    %2111 = vmatpush.msra.mxu0 0.0
    %2112 = vmatpush.msra.mxu0 0.0
    %2113 = vmatpush.msra.mxu0 0.0
    %2114 = vmatpush.msra.mxu0 0.0
    %2115 = vmatpush.msra.mxu0 0.0
    %2116 = vmatpush.msra.mxu0 0.0
    %2117 = vmatpush.msra.mxu0 0.0
    %2118 = vmatpush.msra.mxu0 0.0
    %2119 = vmatpush.msra.mxu0 0.0
    %2120 = vmatpush.msra.mxu0 0.0
    %2121 = vmatpush.msra.mxu0 0.0
    %2122 = vmatpush.msra.mxu0 0.0
    %v2123 = vand.u32 %v1341, 4294901760
    %2124 = vmatpush.msra.mxu0 %v2123
    %v2125 = vand.u32 %v1337, 4294901760
    %2126 = vmatpush.msra.mxu0 %v2125
    %v2127 = vand.u32 %v1344, 4294901760
    %v2128 = vsub.f32 %v1344, %v2127
    %v2129 = vand.u32 %v2128, 4294901760
    %v2130 = vsub.f32 %v2128, %v2129
    %v2131 = vand.u32 %v2130, 4294901760
    %2132 = vmatmul.f32.gmra.mxu0 %v2131
    %v2133 = vpop.f32.mrf.mxu0
    %v2134 = vadd.f32 0.0, %v2133
    %v2135 = vand.u32 %v1347, 4294901760
    %v2136 = vsub.f32 %v1347, %v2135
    %v2137 = vand.u32 %v2136, 4294901760
    %v2138 = vsub.f32 %v2136, %v2137
    %v2139 = vand.u32 %v2138, 4294901760
    %2140 = vmatmul.f32.gmra.mxu0 %v2139
    %v2141 = vpop.f32.mrf.mxu0
    %v2142 = vadd.f32 0.0, %v2141
    %2143 = vdwg.mxu0
    %2144 = vmatpush.msra.mxu0 0.0
    %2145 = vmatpush.msra.mxu0 0.0
    %2146 = vmatpush.msra.mxu0 0.0
    %2147 = vmatpush.msra.mxu0 0.0
    %2148 = vmatpush.msra.mxu0 0.0
    %2149 = vmatpush.msra.mxu0 0.0
    %2150 = vmatpush.msra.mxu0 0.0
    %2151 = vmatpush.msra.mxu0 0.0
    %2152 = vmatpush.msra.mxu0 0.0
    %2153 = vmatpush.msra.mxu0 0.0
    %2154 = vmatpush.msra.mxu0 0.0
    %2155 = vmatpush.msra.mxu0 0.0
    %2156 = vmatpush.msra.mxu0 0.0
    %2157 = vmatpush.msra.mxu0 0.0
    %v2158 = vand.u32 %v1341, 4294901760
    %v2159 = vsub.f32 %v1341, %v2158
    %v2160 = vand.u32 %v2159, 4294901760
    %v2161 = vsub.f32 %v2159, %v2160
    %v2162 = vand.u32 %v2161, 4294901760
    %2163 = vmatpush.msra.mxu0 %v2162
    %v2164 = vand.u32 %v1337, 4294901760
    %v2165 = vsub.f32 %v1337, %v2164
    %v2166 = vand.u32 %v2165, 4294901760
    %v2167 = vsub.f32 %v2165, %v2166
    %v2168 = vand.u32 %v2167, 4294901760
    %2169 = vmatpush.msra.mxu0 %v2168
    %v2170 = vand.u32 %v1344, 4294901760
    %2171 = vmatmul.f32.gmra.mxu0 %v2170
    %v2172 = vpop.f32.mrf.mxu0
    %v2173 = vadd.f32 %v2134, %v2172
    %v2174 = vand.u32 %v1347, 4294901760
    %2175 = vmatmul.f32.gmra.mxu0 %v2174
    %v2176 = vpop.f32.mrf.mxu0
    %v2177 = vadd.f32 %v2142, %v2176
    %2178 = vdwg.mxu0
    %2179 = vmatpush.msra.mxu0 0.0
    %2180 = vmatpush.msra.mxu0 0.0
    %2181 = vmatpush.msra.mxu0 0.0
    %2182 = vmatpush.msra.mxu0 0.0
    %2183 = vmatpush.msra.mxu0 0.0
    %2184 = vmatpush.msra.mxu0 0.0
    %2185 = vmatpush.msra.mxu0 0.0
    %2186 = vmatpush.msra.mxu0 0.0
    %2187 = vmatpush.msra.mxu0 0.0
    %2188 = vmatpush.msra.mxu0 0.0
    %2189 = vmatpush.msra.mxu0 0.0
    %2190 = vmatpush.msra.mxu0 0.0
    %2191 = vmatpush.msra.mxu0 0.0
    %2192 = vmatpush.msra.mxu0 0.0
    %v2193 = vand.u32 %v1341, 4294901760
    %v2194 = vsub.f32 %v1341, %v2193
    %2195 = vmatpush.msra.mxu0 %v2194
    %v2196 = vand.u32 %v1337, 4294901760
    %v2197 = vsub.f32 %v1337, %v2196
    %2198 = vmatpush.msra.mxu0 %v2197
    %v2199 = vand.u32 %v1344, 4294901760
    %v2200 = vsub.f32 %v1344, %v2199
    %2201 = vmatmul.f32.gmra.mxu0 %v2200
    %v2202 = vpop.f32.mrf.mxu0
    %v2203 = vadd.f32 %v2173, %v2202
    %v2204 = vand.u32 %v1347, 4294901760
    %v2205 = vsub.f32 %v1347, %v2204
    %2206 = vmatmul.f32.gmra.mxu0 %v2205
    %v2207 = vpop.f32.mrf.mxu0
    %v2208 = vadd.f32 %v2177, %v2207
    %2209 = vdwg.mxu0
    %2210 = vmatpush.msra.mxu0 0.0
    %2211 = vmatpush.msra.mxu0 0.0
    %2212 = vmatpush.msra.mxu0 0.0
    %2213 = vmatpush.msra.mxu0 0.0
    %2214 = vmatpush.msra.mxu0 0.0
    %2215 = vmatpush.msra.mxu0 0.0
    %2216 = vmatpush.msra.mxu0 0.0
    %2217 = vmatpush.msra.mxu0 0.0
    %2218 = vmatpush.msra.mxu0 0.0
    %2219 = vmatpush.msra.mxu0 0.0
    %2220 = vmatpush.msra.mxu0 0.0
    %2221 = vmatpush.msra.mxu0 0.0
    %2222 = vmatpush.msra.mxu0 0.0
    %2223 = vmatpush.msra.mxu0 0.0
    %v2224 = vand.u32 %v1341, 4294901760
    %2225 = vmatpush.msra.mxu0 %v2224
    %v2226 = vand.u32 %v1337, 4294901760
    %2227 = vmatpush.msra.mxu0 %v2226
    %v2228 = vand.u32 %v1344, 4294901760
    %v2229 = vsub.f32 %v1344, %v2228
    %v2230 = vand.u32 %v2229, 4294901760
    %2231 = vmatmul.f32.gmra.mxu0 %v2230
    %v2232 = vpop.f32.mrf.mxu0
    %v2233 = vadd.f32 %v2203, %v2232
    %v2234 = vand.u32 %v1347, 4294901760
    %v2235 = vsub.f32 %v1347, %v2234
    %v2236 = vand.u32 %v2235, 4294901760
    %2237 = vmatmul.f32.gmra.mxu0 %v2236
    %v2238 = vpop.f32.mrf.mxu0
    %v2239 = vadd.f32 %v2208, %v2238
    %2240 = vdwg.mxu0
    %2241 = vmatpush.msra.mxu0 0.0
    %2242 = vmatpush.msra.mxu0 0.0
    %2243 = vmatpush.msra.mxu0 0.0
    %2244 = vmatpush.msra.mxu0 0.0
    %2245 = vmatpush.msra.mxu0 0.0
    %2246 = vmatpush.msra.mxu0 0.0
    %2247 = vmatpush.msra.mxu0 0.0
    %2248 = vmatpush.msra.mxu0 0.0
    %2249 = vmatpush.msra.mxu0 0.0
    %2250 = vmatpush.msra.mxu0 0.0
    %2251 = vmatpush.msra.mxu0 0.0
    %2252 = vmatpush.msra.mxu0 0.0
    %2253 = vmatpush.msra.mxu0 0.0
    %2254 = vmatpush.msra.mxu0 0.0
    %v2255 = vand.u32 %v1341, 4294901760
    %v2256 = vsub.f32 %v1341, %v2255
    %v2257 = vand.u32 %v2256, 4294901760
    %2258 = vmatpush.msra.mxu0 %v2257
    %v2259 = vand.u32 %v1337, 4294901760
    %v2260 = vsub.f32 %v1337, %v2259
    %v2261 = vand.u32 %v2260, 4294901760
    %2262 = vmatpush.msra.mxu0 %v2261
    %v2263 = vand.u32 %v1344, 4294901760
    %2264 = vmatmul.f32.gmra.mxu0 %v2263
    %v2265 = vpop.f32.mrf.mxu0
    %v2266 = vadd.f32 %v2233, %v2265
    %v2267 = vand.u32 %v1347, 4294901760
    %2268 = vmatmul.f32.gmra.mxu0 %v2267
    %v2269 = vpop.f32.mrf.mxu0
    %v2270 = vadd.f32 %v2239, %v2269
    %2271 = vdwg.mxu0
    %2272 = vmatpush.msra.mxu0 0.0
    %2273 = vmatpush.msra.mxu0 0.0
    %2274 = vmatpush.msra.mxu0 0.0
    %2275 = vmatpush.msra.mxu0 0.0
    %2276 = vmatpush.msra.mxu0 0.0
    %2277 = vmatpush.msra.mxu0 0.0
    %2278 = vmatpush.msra.mxu0 0.0
    %2279 = vmatpush.msra.mxu0 0.0
    %2280 = vmatpush.msra.mxu0 0.0
    %2281 = vmatpush.msra.mxu0 0.0
    %2282 = vmatpush.msra.mxu0 0.0
    %2283 = vmatpush.msra.mxu0 0.0
    %2284 = vmatpush.msra.mxu0 0.0
    %2285 = vmatpush.msra.mxu0 0.0
    %v2286 = vand.u32 %v1341, 4294901760
    %2287 = vmatpush.msra.mxu0 %v2286
    %v2288 = vand.u32 %v1337, 4294901760
    %2289 = vmatpush.msra.mxu0 %v2288
    %v2290 = vand.u32 %v1344, 4294901760
    %2291 = vmatmul.f32.gmra.mxu0 %v2290
    %v2292 = vpop.f32.mrf.mxu0
    %v2293 = vadd.f32 %v2266, %v2292
    %v2294 = vand.u32 %v1347, 4294901760
    %2295 = vmatmul.f32.gmra.mxu0 %v2294
    %v2296 = vpop.f32.mrf.mxu0
    %v2297 = vadd.f32 %v2270, %v2296
    %2298 = vdwg.mxu0
    %v2299 = vmul.f32 %v1533, %v1533
    %v2300 = vmul.f32 %v1537, %v1537
    %v2301 = vmul.f32 %v1723, %v1723
    %v2302 = vmul.f32 %v1727, %v1727
    %v2303 = vmul.f32 %v1533, %v1723
    %v2304 = vmul.f32 %v1537, %v1727
    %v2305 = vsub.f32 %v1913, %v2299
    %v2306 = vsub.f32 %v1917, %v2300
    %v2307 = vsub.f32 %v2103, %v2301
    %v2308 = vsub.f32 %v2107, %v2302
    %v2309 = vsub.f32 %v2293, %v2303
    %v2310 = vsub.f32 %v2297, %v2304
    %v2311 = vmul.f32 %v2303, 2.0
    %v2312 = vmul.f32 %v2304, 2.0
    %v2313 = vadd.f32 %v2311, 0.0001
    %v2314 = vadd.f32 %v2312, 0.0001
    %v2315 = vmul.f32 %v2309, 2.0
    %v2316 = vmul.f32 %v2310, 2.0
    %v2317 = vadd.f32 %v2315, 0.0009
    %v2318 = vadd.f32 %v2316, 0.0009
    %v2319 = vmul.f32 %v2313, %v2317
    %v2320 = vmul.f32 %v2314, %v2318
    %v2321 = vadd.f32 %v2299, %v2301
    %v2322 = vadd.f32 %v2300, %v2302
    %v2323 = vadd.f32 %v2321, 0.0001
    %v2324 = vadd.f32 %v2322, 0.0001
    %v2325 = vadd.f32 %v2305, %v2307
    %v2326 = vadd.f32 %v2306, %v2308
    %v2327 = vadd.f32 %v2325, 0.0009
    %v2328 = vadd.f32 %v2326, 0.0009
    %v2329 = vmul.f32 %v2323, %v2327
    %v2330 = vmul.f32 %v2324, %v2328
    %v2331 = vrcp.pop %v2329
    %v2332 = vmul.f32 %v2329, %v2331
    %v2333 = vsub.f32 1.0, %v2332
    %v2334 = vmul.f32 %v2331, %v2333
    %v2335 = vadd.f32 %v2331, %v2334
    %vm2336 = vweird.f32 %v2329
    %vm2337 = vweird.f32 %v2331
    %vm2338 = vmor %vm2336, %vm2337
    %v2339 = vsel %vm2338, %v2331, %v2335
    %v2340 = vand.u32 2147483647, %v2329
    %vm2341 = vcmp.eq.f32.partialorder %v2340, 8.507059e+37
    %v2342 = vand.u32 %v2329, 2147483648
    %v2343 = vor.u32 1.1754944e-38, %v2342
    %v2344 = vsel %vm2341, %v2343, %v2339
    %v2345 = vmul.f32 %v2319, %v2344
    %v2346 = vrcp.pop %v2330
    %v2347 = vmul.f32 %v2330, %v2346
    %v2348 = vsub.f32 1.0, %v2347
    %v2349 = vmul.f32 %v2346, %v2348
    %v2350 = vadd.f32 %v2346, %v2349
    %vm2351 = vweird.f32 %v2330
    %vm2352 = vweird.f32 %v2346
    %vm2353 = vmor %vm2351, %vm2352
    %v2354 = vsel %vm2353, %v2346, %v2350
    %v2355 = vand.u32 2147483647, %v2330
    %vm2356 = vcmp.eq.f32.partialorder %v2355, 8.507059e+37
    %v2357 = vand.u32 %v2330, 2147483648
    %v2358 = vor.u32 1.1754944e-38, %v2357
    %v2359 = vsel %vm2356, %v2358, %v2354
    %v2360 = vmul.f32 %v2320, %v2359
    %v2361 = vmul.f32 %v2345, %v695
    %v2362 = vmul.f32 %v2360, %v696
    %v2363 = vsub.f32 1.0, %v2361
    %v2364 = vsub.f32 1.0, %v2362
    %v2365 = vmul.f32 %v2363, 0.5
    %v2366 = vmul.f32 %v2364, 0.5
    %v2367 = vmax.f32 %v2365, 0.0
    %v2368 = vmax.f32 %v2366, 0.0
    %v2369 = vmin.f32 %v2367, 1.0
    %v2370 = vmin.f32 %v2368, 1.0
    %2371 = vst [vmem:[#allocation11] sm:$0xff] %v2369
    %2372 = vst [vmem:[#allocation11 + $0x8] sm:$0xff] %v2370
    // Predicated region
    $region34: #{tpu_custom_call.1} parent=1 // pred_check
      _
    $region35: #{tpu_custom_call.1} parent=1 // pred_check_branch
      %2374 = sbr.rel (0) target = $region37
    $region36: #{tpu_custom_call.1} parent=1 // pred_region
      %2376 = vsyncadd [#allocation5], 0
      %s2377 = sshll.u32 [#allocation11], 4
      %s2378 = int_to_ptr.vmem [resolvable:$true] %s2377
      %s2379 = sshll.u32 %s4, 4
      %s2380 = int_to_ptr.hbm [resolvable:$true] %s2379
      %2385 = dma.vmem_to_hbm [thread:$0]  %s2378, 256, %s2380, [#allocation5], 128, 128, 8
    $region37: #{tpu_custom_call.1} parent=1 // pred_fallthru
      _
    // Predicated region
    $region38: #{tpu_custom_call.1} parent=1 // pred_check
      _
    $region39: #{tpu_custom_call.1} parent=1 // pred_check_branch
      %2387 = sbr.rel (0) target = $region41
    $region40: #{tpu_custom_call.1} parent=1 // pred_region
      %2389 = dma.done [#allocation5], 256
    $region41: #{tpu_custom_call.1} parent=1 // pred_fallthru
      _
    %2390 = vsyncpa [#allocation4], 1
    %2391 = vsyncpa [#allocation7], 1
    %2392 = vsyncpa [#allocation10], 1
    %2393 = vsyncpa [#allocation5], 1

</llo_original>
